<compile_context>
chip_gen: v5e
topology: v5e:2x2
jax: 0.10.0
libtpu: 0.0.40
codegen_flags: <defaults>
</compile_context>

<pallas_src>
import functools

import jax
import jax.numpy as jnp
from jax.experimental import pallas as pl
from jax.experimental.pallas import tpu as pltpu

LATENT_DIM = 100
NEG_SLOPE = 0.01                     # F.leaky_relu default
VMEM_LIMIT_BYTES = 48 * 1024 * 1024  # safe on v5e/v6e (128 MiB) and v7x (64 MiB)


def _pick_rows(h, w, target):
    """Largest row-tile that divides h with roughly tile_rows * w <= target."""
    tr = max(1, min(h, target // max(w, 1)))
    while h % tr != 0:
        tr -= 1
    return tr


def _pick_chunk(n, limit=2048):
    """Full extent if small, else the largest 128-multiple divisor <= limit."""
    if n <= 2 * limit:
        return n
    c = limit
    while c >= 128 and n % c != 0:
        c -= 128
    return c if c >= 128 else n


def _leaky(y):
    return jnp.where(y > 0, y, NEG_SLOPE * y)


# ---------------------------------------------------------------------------
# Fused 3x3 "same" convolution (bias + activation fused, halo built in VMEM)
# ---------------------------------------------------------------------------
def _conv3x3_kernel(x_ref, top_ref, bot_ref, w_ref, b_ref, o_ref, *, act):
    ri = pl.program_id(1)
    nr = pl.num_programs(1)
    _, tr, W, Cin = x_ref.shape
    Cout = o_ref.shape[-1]

    x = x_ref[0]                                   # (tr, W, Cin)   bf16
    top = top_ref[0]                               # (1,  W, Cin)
    bot = bot_ref[0]
    # zero the halo rows at the image boundary
    top = jnp.where(ri == 0, jnp.zeros_like(top), top)
    bot = jnp.where(ri == nr - 1, jnp.zeros_like(bot), bot)

    xh = jnp.concatenate([top, x, bot], axis=0)    # (tr+2, W, Cin)
    zc = jnp.zeros((tr + 2, 1, Cin), dtype=xh.dtype)
    xp = jnp.concatenate([zc, xh, zc], axis=1)     # (tr+2, W+2, Cin) zero-padded

    acc = None
    for ky in range(3):
        for kx in range(3):
            lhs = xp[ky:ky + tr, kx:kx + W, :].reshape(tr * W, Cin)
            d = jnp.dot(lhs, w_ref[ky * 3 + kx],
                        preferred_element_type=jnp.float32)
            acc = d if acc is None else acc + d

    y = acc + b_ref[...]                           # (tr*W, Cout) f32
    if act == "leaky_relu":
        y = _leaky(y)
    elif act == "tanh":
        y = jnp.tanh(y)
    o_ref[0] = y.reshape(tr, W, Cout).astype(o_ref.dtype)


def conv3x3(x, w9, b, act, out_dtype=jnp.bfloat16, block_rows=None):
    """x: NHWC (bf16).  w9: (9, Cin, Cout) bf16.  b: (1, Cout) f32."""
    B, H, W, Cin = x.shape
    Cout = w9.shape[-1]
    tr = block_rows if block_rows is not None else _pick_rows(H, W, 8192)
    nr = H // tr

    return pl.pallas_call(
        functools.partial(_conv3x3_kernel, act=act),
        out_shape=jax.ShapeDtypeStruct((B, H, W, Cout), out_dtype),
        grid=(B, nr),
        in_specs=[
            pl.BlockSpec((1, tr, W, Cin), lambda bi, ri: (bi, ri, 0, 0)),
            # 1-row halos: block size 1 along H -> index map returns row index.
            pl.BlockSpec((1, 1, W, Cin),
                         lambda bi, ri: (bi, jnp.maximum(ri * tr - 1, 0), 0, 0)),
            pl.BlockSpec((1, 1, W, Cin),
                         lambda bi, ri: (bi, jnp.minimum(ri * tr + tr, H - 1), 0, 0)),
            pl.BlockSpec((9, Cin, Cout), lambda bi, ri: (0, 0, 0)),
            pl.BlockSpec((1, Cout), lambda bi, ri: (0, 0)),
        ],
        out_specs=pl.BlockSpec((1, tr, W, Cout), lambda bi, ri: (bi, ri, 0, 0)),
        compiler_params=pltpu.CompilerParams(
            dimension_semantics=("parallel", "parallel"),
            vmem_limit_bytes=VMEM_LIMIT_BYTES),
    )(x, x, x, w9, b)


# ---------------------------------------------------------------------------
# MaxPool2d(2) — full-tensor input, 2x2 reduction done in VMEM
# ---------------------------------------------------------------------------
def _maxpool2x2_kernel(x_ref, o_ref):
    _, th, W, C = x_ref.shape
    tr = th // 2
    Wo = W // 2
    x = x_ref[0]                                   # (2*tr, W, C)
    x = x.reshape(tr, 2, W, C)
    x = jnp.maximum(x[:, 0], x[:, 1])              # (tr, W, C)   row-pooled
    x = x.reshape(tr, Wo, 2, C)
    o_ref[0] = jnp.maximum(x[:, :, 0], x[:, :, 1])  # (tr, Wo, C)


def maxpool2x2(x, block_rows=None):
    B, H, W, C = x.shape
    Ho, Wo = H // 2, W // 2
    tr = block_rows if block_rows is not None else _pick_rows(Ho, Wo, 4096)
    return pl.pallas_call(
        _maxpool2x2_kernel,
        out_shape=jax.ShapeDtypeStruct((B, Ho, Wo, C), x.dtype),
        grid=(B, Ho // tr),
        in_specs=[pl.BlockSpec((1, 2 * tr, W, C), lambda bi, ri: (bi, ri, 0, 0))],
        out_specs=pl.BlockSpec((1, tr, Wo, C), lambda bi, ri: (bi, ri, 0, 0)),
        compiler_params=pltpu.CompilerParams(
            dimension_semantics=("parallel", "parallel"),
            vmem_limit_bytes=VMEM_LIMIT_BYTES),
    )(x)


# ---------------------------------------------------------------------------
# ConvTranspose2d(k=2, s=2) — matmul + bias + leaky_relu + in-kernel interleave
# ---------------------------------------------------------------------------
def _deconv2x2_kernel(x_ref, w_ref, b_ref, o_ref):
    _, tr, W, Cin = x_ref.shape
    C4 = w_ref.shape[-1]
    Cout = C4 // 4
    half = 2 * Cout

    lhs = x_ref[0].reshape(tr * W, Cin)
    y = jnp.dot(lhs, w_ref[...], preferred_element_type=jnp.float32)
    y = _leaky(y + b_ref[...])                      # (tr*W, 4*Cout) f32
    y = y.astype(o_ref.dtype)

    # columns ordered (ky, kx, co): split ky, interleave rows then columns.
    y0 = y[:, :half].reshape(tr, W, half)           # ky = 0
    y1 = y[:, half:].reshape(tr, W, half)           # ky = 1
    yk = jnp.stack([y0, y1], axis=1)                # (tr, 2, W, 2*Cout)
    yk = yk.reshape(2 * tr, W, half)                # rows: 2*i + ky
    o_ref[0] = yk.reshape(2 * tr, 2 * W, Cout)      # cols: 2*j + kx


def deconv2x2_s2(x, wmat, b4, out_dtype=jnp.bfloat16, block_rows=None):
    """x: NHWC bf16.  wmat: (Cin, 4*Cout) bf16 (cols (ky,kx,co)).  b4: (1,4*Cout) f32."""
    B, H, W, Cin = x.shape
    C4 = wmat.shape[-1]
    Cout = C4 // 4
    tr = block_rows if block_rows is not None else _pick_rows(H, W, 2048)
    return pl.pallas_call(
        _deconv2x2_kernel,
        out_shape=jax.ShapeDtypeStruct((B, 2 * H, 2 * W, Cout), out_dtype),
        grid=(B, H // tr),
        in_specs=[
            pl.BlockSpec((1, tr, W, Cin), lambda bi, ri: (bi, ri, 0, 0)),
            pl.BlockSpec((Cin, C4), lambda bi, ri: (0, 0)),
            pl.BlockSpec((1, C4), lambda bi, ri: (0, 0)),
        ],
        out_specs=pl.BlockSpec((1, 2 * tr, 2 * W, Cout),
                               lambda bi, ri: (bi, ri, 0, 0)),
        compiler_params=pltpu.CompilerParams(
            dimension_semantics=("parallel", "parallel"),
            vmem_limit_bytes=VMEM_LIMIT_BYTES),
    )(x, wmat, b4)


# ---------------------------------------------------------------------------
# Linear: y = act(x @ w + b), tiled over (N, K), f32 accumulation in o_ref
# ---------------------------------------------------------------------------
def _linear_kernel(x_ref, w_ref, b_ref, o_ref, *, act):
    k = pl.program_id(1)

    @pl.when(k == 0)
    def _():
        o_ref[...] = jnp.zeros_like(o_ref)

    o_ref[...] += jnp.dot(x_ref[...], w_ref[...],
                          preferred_element_type=jnp.float32)

    @pl.when(k == pl.num_programs(1) - 1)
    def _():
        y = o_ref[...] + b_ref[...]
        if act == "leaky_relu":
            y = _leaky(y)
        o_ref[...] = y


def linear(x, w, b, act="none", k_chunk=None, n_chunk=None):
    """x: (M, K) bf16.  w: (K, N) bf16.  b: (1, N) f32.  Returns (M, N) f32."""
    M, K = x.shape
    _, N = w.shape
    tk = k_chunk if k_chunk is not None else _pick_chunk(K)
    tn = n_chunk if n_chunk is not None else _pick_chunk(N)
    nn, nk = N // tn, K // tk
    return pl.pallas_call(
        functools.partial(_linear_kernel, act=act),
        out_shape=jax.ShapeDtypeStruct((M, N), jnp.float32),
        grid=(nn, nk),
        in_specs=[
            pl.BlockSpec((M, tk), lambda j, k: (0, k)),
            pl.BlockSpec((tk, tn), lambda j, k: (k, j)),
            pl.BlockSpec((1, tn), lambda j, k: (0, j)),
        ],
        out_specs=pl.BlockSpec((M, tn), lambda j, k: (0, j)),
        compiler_params=pltpu.CompilerParams(
            dimension_semantics=("parallel", "arbitrary"),
            vmem_limit_bytes=VMEM_LIMIT_BYTES),
    )(x, w, b)


# ---------------------------------------------------------------------------
# Parameters: PyTorch-layout synthetic init, then one-time kernel-layout prep
# ---------------------------------------------------------------------------
def init_params(key):
    def uinit(k, shape, fan_in):
        bound = 1.0 / float(fan_in) ** 0.5
        return jax.random.uniform(k, shape, jnp.float32, -bound, bound)

    spec = [
        ("econv1_w", (64, 1, 3, 3), 9), ("econv1_b", (64,), 9),
        ("econv2_w", (64, 64, 3, 3), 576), ("econv2_b", (64,), 576),
        ("econv3_w", (64, 64, 3, 3), 576), ("econv3_b", (64,), 576),
        ("econv4_w", (64, 64, 3, 3), 576), ("econv4_b", (64,), 576),
        ("elinear0_w", (64 * 16 * 16, 1000), 64 * 16 * 16),
        ("elinear0_b", (1000,), 64 * 16 * 16),
        ("elinear1_w", (1000, LATENT_DIM), 1000), ("elinear1_b", (LATENT_DIM,), 1000),
        ("dlinear0_w", (LATENT_DIM, 1000), LATENT_DIM), ("dlinear0_b", (1000,), LATENT_DIM),
        ("dlinear1_w", (1000, 64 * 16 * 16), 1000), ("dlinear1_b", (64 * 16 * 16,), 1000),
        ("dconv1_w", (64, 64, 2, 2), 256), ("dconv1_b", (64,), 256),
        ("dconv2_w", (64, 64, 2, 2), 256), ("dconv2_b", (64,), 256),
        ("dconv3_w", (64, 64, 2, 2), 256), ("dconv3_b", (64,), 256),
        ("dconv4_w", (64, 64, 2, 2), 256), ("dconv4_b", (64,), 256),
        ("dconv5_w", (64, 1, 3, 3), 9), ("dconv5_b", (1,), 9),
    ]
    keys = jax.random.split(key, len(spec))
    return {name: uinit(k, shape, fan) for (name, shape, fan), k in zip(spec, keys)}


def prepare_params(p):
    """One-time conversion to kernel-ready layouts/dtypes (done outside jit)."""
    kp = {}
    # econv1: pad Cin 1 -> 8 with zeros (keeps lane shapes non-degenerate).
    w = jnp.transpose(p["econv1_w"], (2, 3, 1, 0))                 # (3,3,1,64)
    w = jnp.pad(w, ((0, 0), (0, 0), (0, 7), (0, 0)))               # (3,3,8,64)
    kp["econv1_w9"] = w.reshape(9, 8, 64).astype(jnp.bfloat16)
    kp["econv1_b"] = p["econv1_b"].reshape(1, -1).astype(jnp.float32)

    for i in (2, 3, 4):
        w = jnp.transpose(p[f"econv{i}_w"], (2, 3, 1, 0)).reshape(9, 64, 64)
        kp[f"econv{i}_w9"] = w.astype(jnp.bfloat16)
        kp[f"econv{i}_b"] = p[f"econv{i}_b"].reshape(1, -1).astype(jnp.float32)

    for name in ("elinear0", "elinear1", "dlinear0", "dlinear1"):
        kp[name + "_w"] = p[name + "_w"].astype(jnp.bfloat16)
        kp[name + "_b"] = p[name + "_b"].reshape(1, -1).astype(jnp.float32)

    for i in (1, 2, 3, 4):
        w = p[f"dconv{i}_w"]                                       # (Cin,Cout,2,2)
        wmat = jnp.transpose(w, (0, 2, 3, 1)).reshape(64, 4 * 64)  # cols (ky,kx,co)
        kp[f"dconv{i}_w"] = wmat.astype(jnp.bfloat16)
        kp[f"dconv{i}_b"] = jnp.tile(p[f"dconv{i}_b"], 4).reshape(1, -1).astype(jnp.float32)

    # dconv5: ConvTranspose2d(64,1,k=3,s=1,p=1) == conv with flipped/transposed
    # kernel.  Pad Cout 1 -> 8 with zeros (tiny) for denser stores.
    w = p["dconv5_w"]                                              # (64,1,3,3)
    wc = jnp.transpose(w[:, :, ::-1, ::-1], (1, 0, 2, 3))          # (1,64,3,3)
    wc = jnp.transpose(wc, (2, 3, 1, 0))                           # (3,3,64,1)
    wc = jnp.pad(wc, ((0, 0), (0, 0), (0, 0), (0, 7)))             # (3,3,64,8)
    kp["dconv5_w9"] = wc.reshape(9, 64, 8).astype(jnp.bfloat16)
    kp["dconv5_b"] = jnp.pad(p["dconv5_b"], (0, 7)).reshape(1, -1).astype(jnp.float32)
    return kp


# ---------------------------------------------------------------------------
# Full forward pass (public API is NCHW, f32 — like the PyTorch module)
# ---------------------------------------------------------------------------
def ae_forward(kp, x):
    B = x.shape[0]
    h = jnp.transpose(x, (0, 2, 3, 1)).astype(jnp.bfloat16)        # NHWC (B,256,256,1)
    h = jnp.pad(h, ((0, 0), (0, 0), (0, 0), (0, 7)))               # channels 1 -> 8

    # encoder
    h = conv3x3(h, kp["econv1_w9"], kp["econv1_b"], "leaky_relu")  # (B,256,256,64)
    h = maxpool2x2(h)                                              # (B,128,128,64)
    h = conv3x3(h, kp["econv2_w9"], kp["econv2_b"], "leaky_relu")
    h = maxpool2x2(h)                                              # (B, 64, 64,64)
    h = conv3x3(h, kp["econv3_w9"], kp["econv3_b"], "leaky_relu")
    h = maxpool2x2(h)                                              # (B, 32, 32,64)
    h = conv3x3(h, kp["econv4_w9"], kp["econv4_b"], "leaky_relu")
    h = maxpool2x2(h)                                              # (B, 16, 16,64)

    h = jnp.transpose(h, (0, 3, 1, 2)).reshape(B, 64 * 16 * 16)    # torch flatten order
    z = linear(h, kp["elinear0_w"], kp["elinear0_b"], "leaky_relu")
    z = linear(z.astype(jnp.bfloat16), kp["elinear1_w"], kp["elinear1_b"], "none")

    # decoder
    z = linear(z.astype(jnp.bfloat16), kp["dlinear0_w"], kp["dlinear0_b"], "leaky_relu")
    z = linear(z.astype(jnp.bfloat16), kp["dlinear1_w"], kp["dlinear1_b"], "leaky_relu")
    h = z.astype(jnp.bfloat16).reshape(B, 64, 16, 16)
    h = jnp.transpose(h, (0, 2, 3, 1))                             # NHWC (B,16,16,64)

    h = deconv2x2_s2(h, kp["dconv1_w"], kp["dconv1_b"])            # (B, 32, 32,64)
    h = deconv2x2_s2(h, kp["dconv2_w"], kp["dconv2_b"])            # (B, 64, 64,64)
    h = deconv2x2_s2(h, kp["dconv3_w"], kp["dconv3_b"])            # (B,128,128,64)
    h = deconv2x2_s2(h, kp["dconv4_w"], kp["dconv4_b"])            # (B,256,256,64)
    h = conv3x3(h, kp["dconv5_w9"], kp["dconv5_b"], "tanh",
                out_dtype=jnp.float32)                             # (B,256,256,8)
    h = h[..., :1]                                                 # drop padded Cout
    return jnp.transpose(h, (0, 3, 1, 2))                          # NCHW (B,1,256,256)


# ---------------------------------------------------------------------------
# Pure-jnp references for small self-tests
# ---------------------------------------------------------------------------
def _conv3x3_ref(x, w9, b, act):
    B, H, W, Cin = x.shape
    xp = jnp.pad(x.astype(jnp.float32), ((0, 0), (1, 1), (1, 1), (0, 0)))
    out = None
    for ky in range(3):
        for kx in range(3):
            t = jnp.einsum("bhwc,cd->bhwd", xp[:, ky:ky + H, kx:kx + W, :],
                           w9[ky * 3 + kx].astype(jnp.float32))
            out = t if out is None else out + t
    out = out + b.reshape(1, 1, 1, -1)
    return _leaky(out) if act == "leaky_relu" else out


def _deconv2x2_ref(x, wmat, b4):
    B, H, W, Cin = x.shape
    Cout = wmat.shape[-1] // 4
    y = jnp.einsum("bhwc,cd->bhwd", x.astype(jnp.float32),
                   wmat.astype(jnp.float32)) + b4.reshape(1, 1, 1, -1)
    y = _leaky(y).reshape(B, H, W, 2, 2, Cout)
    return jnp.transpose(y, (0, 1, 3, 2, 4, 5)).reshape(B, 2 * H, 2 * W, Cout)


if __name__ == "__main__":
    key = jax.random.PRNGKey(0)
    k_params, k_x, k_t1, k_t2, k_t3, k_t4 = jax.random.split(key, 6)

    # ---- small correctness self-tests of each Pallas primitive ----
    # fused conv3x3 (2 row tiles -> exercises inter-tile halo handling)
    xt = jax.random.normal(k_t1, (1, 16, 16, 64), jnp.float32).astype(jnp.bfloat16)
    wt = jax.random.uniform(k_t2, (9, 64, 64), jnp.float32, -0.05, 0.05).astype(jnp.bfloat16)
    bt = jax.random.uniform(k_t3, (1, 64), jnp.float32, -0.05, 0.05)
    got = conv3x3(xt, wt, bt, "leaky_relu", out_dtype=jnp.float32, block_rows=8)
    ref = _conv3x3_ref(xt, wt, bt, "leaky_relu")
    assert float(jnp.max(jnp.abs(got - ref))) < 2e-2

    # maxpool
    gotp = maxpool2x2(xt, block_rows=4)
    refp = jnp.max(xt.reshape(1, 8, 2, 8, 2, 64), axis=(2, 4))
    assert bool(jnp.array_equal(gotp, refp))

    # deconv 2x2 stride 2 (in-kernel interleave)
    wmt = jax.random.uniform(k_t2, (64, 256), jnp.float32, -0.05, 0.05).astype(jnp.bfloat16)
    b4t = jnp.tile(bt, (1, 4))
    gotd = deconv2x2_s2(xt, wmt, b4t, out_dtype=jnp.float32, block_rows=8)
    refd = _deconv2x2_ref(xt, wmt, b4t)
    assert float(jnp.max(jnp.abs(gotd - refd))) < 2e-2

    # linear with K and N tiling (accumulation path)
    xl = jax.random.normal(k_t4, (2, 512), jnp.float32).astype(jnp.bfloat16)
    wl = jax.random.uniform(k_t4, (512, 256), jnp.float32, -0.05, 0.05).astype(jnp.bfloat16)
    bl = jax.random.uniform(k_t4, (1, 256), jnp.float32, -0.05, 0.05)
    gotl = linear(xl, wl, bl, "leaky_relu", k_chunk=128, n_chunk=128)
    refl = _leaky(xl.astype(jnp.float32) @ wl.astype(jnp.float32) + bl)
    assert float(jnp.max(jnp.abs(gotl - refl))) < 2e-2

    # ---- full model (spatial size fixed to 256x256 by Linear(64*16*16)) ----
    params = init_params(k_params)
    kparams = prepare_params(params)
    B = 2
    x = jax.random.normal(k_x, (B, 1, 256, 256), dtype=jnp.float32)

    fwd = jax.jit(ae_forward)
    recon = fwd(kparams, x)
    jax.block_until_ready(recon)

    assert recon.shape == (B, 1, 256, 256), recon.shape
    assert recon.dtype == jnp.float32
    assert bool(jnp.all(jnp.isfinite(recon)))
    assert bool(jnp.all(jnp.abs(recon) <= 1.0 + 1e-5))  # tanh output range

    print("KERNEL_OK")
</pallas_src>

<mosaic_0001>
module attributes {stable_mosaic.version = 11 : i64} {
  func.func @_conv3x3_kernel(%arg0: i32, %arg1: i32, %arg2: memref<1x8x16x64xbf16, #tpu.memory_space<vmem>>, %arg3: memref<1x1x16x64xbf16, #tpu.memory_space<vmem>>, %arg4: memref<1x1x16x64xbf16, #tpu.memory_space<vmem>>, %arg5: memref<9x64x64xbf16, #tpu.memory_space<vmem>>, %arg6: memref<1x64xf32, #tpu.memory_space<vmem>>, %arg7: memref<1x8x16x64xf32, #tpu.memory_space<vmem>>) attributes {dimension_semantics = [#tpu.dimension_semantics<parallel>, #tpu.dimension_semantics<parallel>], iteration_bounds = array<i64: 1, 2>, scalar_prefetch = 0 : i64, scratch_operands = 0 : i64, tpu.core_type = #tpu.core_type<tc>, window_params = [{transform_indices = @transform_0, window_bounds = array<i64: 1, 8, 16, 64>}, {transform_indices = @transform_1, window_bounds = array<i64: 1, 1, 16, 64>}, {transform_indices = @transform_2, window_bounds = array<i64: 1, 1, 16, 64>}, {pipeline_mode = #tpu.pipeline_mode<synchronous>, transform_indices = @transform_3, window_bounds = array<i64: 9, 64, 64>}, {pipeline_mode = #tpu.pipeline_mode<synchronous>, transform_indices = @transform_4, window_bounds = array<i64: 1, 64>}, {transform_indices = @transform_5, window_bounds = array<i64: 1, 8, 16, 64>}]} {
    %c0 = arith.constant 0 : index
    %c0_0 = arith.constant 0 : index
    %c0_1 = arith.constant 0 : index
    %c0_2 = arith.constant 0 : index
    %0 = vector.load %arg2[%c0, %c0_0, %c0_1, %c0_2] : memref<1x8x16x64xbf16, #tpu.memory_space<vmem>>, vector<1x8x16x64xbf16>
    %1 = vector.shape_cast %0 : vector<1x8x16x64xbf16> to vector<8x16x64xbf16>
    %c0_3 = arith.constant 0 : index
    %c0_4 = arith.constant 0 : index
    %c0_5 = arith.constant 0 : index
    %c0_6 = arith.constant 0 : index
    %2 = vector.load %arg3[%c0_3, %c0_4, %c0_5, %c0_6] : memref<1x1x16x64xbf16, #tpu.memory_space<vmem>>, vector<1x1x16x64xbf16>
    %3 = vector.shape_cast %2 : vector<1x1x16x64xbf16> to vector<1x16x64xbf16>
    %c0_7 = arith.constant 0 : index
    %c0_8 = arith.constant 0 : index
    %c0_9 = arith.constant 0 : index
    %c0_10 = arith.constant 0 : index
    %4 = vector.load %arg4[%c0_7, %c0_8, %c0_9, %c0_10] : memref<1x1x16x64xbf16, #tpu.memory_space<vmem>>, vector<1x1x16x64xbf16>
    %5 = vector.shape_cast %4 : vector<1x1x16x64xbf16> to vector<1x16x64xbf16>
    %c0_i32 = arith.constant 0 : i32
    %6 = arith.cmpi eq, %arg1, %c0_i32 : i32
    %cst = arith.constant 0.000000e+00 : bf16
    %7 = vector.broadcast %cst : bf16 to vector<1x16x64xbf16>
    %8 = arith.select %6, %7, %3 : vector<1x16x64xbf16>
    %c1_i32 = arith.constant 1 : i32
    %9 = arith.cmpi eq, %arg1, %c1_i32 : i32
    %cst_11 = arith.constant 0.000000e+00 : bf16
    %10 = vector.broadcast %cst_11 : bf16 to vector<1x16x64xbf16>
    %11 = arith.select %9, %10, %5 : vector<1x16x64xbf16>
    %12 = tpu.concatenate %8, %1, %11 in 0 : vector<1x16x64xbf16>, vector<8x16x64xbf16>, vector<1x16x64xbf16> -> vector<10x16x64xbf16>
    %cst_12 = arith.constant 0.000000e+00 : bf16
    %13 = vector.broadcast %cst_12 : bf16 to vector<10x1x64xbf16>
    %14 = tpu.concatenate %13, %12, %13 in 1 : vector<10x1x64xbf16>, vector<10x16x64xbf16>, vector<10x1x64xbf16> -> vector<10x18x64xbf16>
    %15 = vector.extract_strided_slice %14 {offsets = [0, 0, 0], sizes = [8, 16, 64], strides = [1, 1, 1]} : vector<10x18x64xbf16> to vector<8x16x64xbf16>
    %16 = vector.shape_cast %15 : vector<8x16x64xbf16> to vector<128x64xbf16>
    %c0_13 = arith.constant 0 : index
    %c0_14 = arith.constant 0 : index
    %c0_15 = arith.constant 0 : index
    %17 = vector.load %arg5[%c0_13, %c0_14, %c0_15] : memref<9x64x64xbf16, #tpu.memory_space<vmem>>, vector<1x64x64xbf16>
    %18 = vector.shape_cast %17 : vector<1x64x64xbf16> to vector<64x64xbf16>
    %cst_16 = arith.constant dense<0.000000e+00> : vector<128x64xf32>
    %19 = tpu.matmul %16, %18, %cst_16 {dimension_numbers = #tpu.dot_dimension_numbers<[1], [0], [0], [1], [0, 0, 1, 1], [], []>} : vector<128x64xbf16>, vector<64x64xbf16>, vector<128x64xf32> -> vector<128x64xf32>
    %20 = vector.extract_strided_slice %14 {offsets = [0, 1, 0], sizes = [8, 16, 64], strides = [1, 1, 1]} : vector<10x18x64xbf16> to vector<8x16x64xbf16>
    %21 = vector.shape_cast %20 : vector<8x16x64xbf16> to vector<128x64xbf16>
    %c1 = arith.constant 1 : index
    %c0_17 = arith.constant 0 : index
    %c0_18 = arith.constant 0 : index
    %22 = vector.load %arg5[%c1, %c0_17, %c0_18] : memref<9x64x64xbf16, #tpu.memory_space<vmem>>, vector<1x64x64xbf16>
    %23 = vector.shape_cast %22 : vector<1x64x64xbf16> to vector<64x64xbf16>
    %cst_19 = arith.constant dense<0.000000e+00> : vector<128x64xf32>
    %24 = tpu.matmul %21, %23, %cst_19 {dimension_numbers = #tpu.dot_dimension_numbers<[1], [0], [0], [1], [0, 0, 1, 1], [], []>} : vector<128x64xbf16>, vector<64x64xbf16>, vector<128x64xf32> -> vector<128x64xf32>
    %25 = arith.addf %19, %24 : vector<128x64xf32>
    %26 = vector.extract_strided_slice %14 {offsets = [0, 2, 0], sizes = [8, 16, 64], strides = [1, 1, 1]} : vector<10x18x64xbf16> to vector<8x16x64xbf16>
    %27 = vector.shape_cast %26 : vector<8x16x64xbf16> to vector<128x64xbf16>
    %c2 = arith.constant 2 : index
    %c0_20 = arith.constant 0 : index
    %c0_21 = arith.constant 0 : index
    %28 = vector.load %arg5[%c2, %c0_20, %c0_21] : memref<9x64x64xbf16, #tpu.memory_space<vmem>>, vector<1x64x64xbf16>
    %29 = vector.shape_cast %28 : vector<1x64x64xbf16> to vector<64x64xbf16>
    %cst_22 = arith.constant dense<0.000000e+00> : vector<128x64xf32>
    %30 = tpu.matmul %27, %29, %cst_22 {dimension_numbers = #tpu.dot_dimension_numbers<[1], [0], [0], [1], [0, 0, 1, 1], [], []>} : vector<128x64xbf16>, vector<64x64xbf16>, vector<128x64xf32> -> vector<128x64xf32>
    %31 = arith.addf %25, %30 : vector<128x64xf32>
    %32 = vector.extract_strided_slice %14 {offsets = [1, 0, 0], sizes = [8, 16, 64], strides = [1, 1, 1]} : vector<10x18x64xbf16> to vector<8x16x64xbf16>
    %33 = vector.shape_cast %32 : vector<8x16x64xbf16> to vector<128x64xbf16>
    %c3 = arith.constant 3 : index
    %c0_23 = arith.constant 0 : index
    %c0_24 = arith.constant 0 : index
    %34 = vector.load %arg5[%c3, %c0_23, %c0_24] : memref<9x64x64xbf16, #tpu.memory_space<vmem>>, vector<1x64x64xbf16>
    %35 = vector.shape_cast %34 : vector<1x64x64xbf16> to vector<64x64xbf16>
    %cst_25 = arith.constant dense<0.000000e+00> : vector<128x64xf32>
    %36 = tpu.matmul %33, %35, %cst_25 {dimension_numbers = #tpu.dot_dimension_numbers<[1], [0], [0], [1], [0, 0, 1, 1], [], []>} : vector<128x64xbf16>, vector<64x64xbf16>, vector<128x64xf32> -> vector<128x64xf32>
    %37 = arith.addf %31, %36 : vector<128x64xf32>
    %38 = vector.extract_strided_slice %14 {offsets = [1, 1, 0], sizes = [8, 16, 64], strides = [1, 1, 1]} : vector<10x18x64xbf16> to vector<8x16x64xbf16>
    %39 = vector.shape_cast %38 : vector<8x16x64xbf16> to vector<128x64xbf16>
    %c4 = arith.constant 4 : index
    %c0_26 = arith.constant 0 : index
    %c0_27 = arith.constant 0 : index
    %40 = vector.load %arg5[%c4, %c0_26, %c0_27] : memref<9x64x64xbf16, #tpu.memory_space<vmem>>, vector<1x64x64xbf16>
    %41 = vector.shape_cast %40 : vector<1x64x64xbf16> to vector<64x64xbf16>
    %cst_28 = arith.constant dense<0.000000e+00> : vector<128x64xf32>
    %42 = tpu.matmul %39, %41, %cst_28 {dimension_numbers = #tpu.dot_dimension_numbers<[1], [0], [0], [1], [0, 0, 1, 1], [], []>} : vector<128x64xbf16>, vector<64x64xbf16>, vector<128x64xf32> -> vector<128x64xf32>
    %43 = arith.addf %37, %42 : vector<128x64xf32>
    %44 = vector.extract_strided_slice %14 {offsets = [1, 2, 0], sizes = [8, 16, 64], strides = [1, 1, 1]} : vector<10x18x64xbf16> to vector<8x16x64xbf16>
    %45 = vector.shape_cast %44 : vector<8x16x64xbf16> to vector<128x64xbf16>
    %c5 = arith.constant 5 : index
    %c0_29 = arith.constant 0 : index
    %c0_30 = arith.constant 0 : index
    %46 = vector.load %arg5[%c5, %c0_29, %c0_30] : memref<9x64x64xbf16, #tpu.memory_space<vmem>>, vector<1x64x64xbf16>
    %47 = vector.shape_cast %46 : vector<1x64x64xbf16> to vector<64x64xbf16>
    %cst_31 = arith.constant dense<0.000000e+00> : vector<128x64xf32>
    %48 = tpu.matmul %45, %47, %cst_31 {dimension_numbers = #tpu.dot_dimension_numbers<[1], [0], [0], [1], [0, 0, 1, 1], [], []>} : vector<128x64xbf16>, vector<64x64xbf16>, vector<128x64xf32> -> vector<128x64xf32>
    %49 = arith.addf %43, %48 : vector<128x64xf32>
    %50 = vector.extract_strided_slice %14 {offsets = [2, 0, 0], sizes = [8, 16, 64], strides = [1, 1, 1]} : vector<10x18x64xbf16> to vector<8x16x64xbf16>
    %51 = vector.shape_cast %50 : vector<8x16x64xbf16> to vector<128x64xbf16>
    %c6 = arith.constant 6 : index
    %c0_32 = arith.constant 0 : index
    %c0_33 = arith.constant 0 : index
    %52 = vector.load %arg5[%c6, %c0_32, %c0_33] : memref<9x64x64xbf16, #tpu.memory_space<vmem>>, vector<1x64x64xbf16>
    %53 = vector.shape_cast %52 : vector<1x64x64xbf16> to vector<64x64xbf16>
    %cst_34 = arith.constant dense<0.000000e+00> : vector<128x64xf32>
    %54 = tpu.matmul %51, %53, %cst_34 {dimension_numbers = #tpu.dot_dimension_numbers<[1], [0], [0], [1], [0, 0, 1, 1], [], []>} : vector<128x64xbf16>, vector<64x64xbf16>, vector<128x64xf32> -> vector<128x64xf32>
    %55 = arith.addf %49, %54 : vector<128x64xf32>
    %56 = vector.extract_strided_slice %14 {offsets = [2, 1, 0], sizes = [8, 16, 64], strides = [1, 1, 1]} : vector<10x18x64xbf16> to vector<8x16x64xbf16>
    %57 = vector.shape_cast %56 : vector<8x16x64xbf16> to vector<128x64xbf16>
    %c7 = arith.constant 7 : index
    %c0_35 = arith.constant 0 : index
    %c0_36 = arith.constant 0 : index
    %58 = vector.load %arg5[%c7, %c0_35, %c0_36] : memref<9x64x64xbf16, #tpu.memory_space<vmem>>, vector<1x64x64xbf16>
    %59 = vector.shape_cast %58 : vector<1x64x64xbf16> to vector<64x64xbf16>
    %cst_37 = arith.constant dense<0.000000e+00> : vector<128x64xf32>
    %60 = tpu.matmul %57, %59, %cst_37 {dimension_numbers = #tpu.dot_dimension_numbers<[1], [0], [0], [1], [0, 0, 1, 1], [], []>} : vector<128x64xbf16>, vector<64x64xbf16>, vector<128x64xf32> -> vector<128x64xf32>
    %61 = arith.addf %55, %60 : vector<128x64xf32>
    %62 = vector.extract_strided_slice %14 {offsets = [2, 2, 0], sizes = [8, 16, 64], strides = [1, 1, 1]} : vector<10x18x64xbf16> to vector<8x16x64xbf16>
    %63 = vector.shape_cast %62 : vector<8x16x64xbf16> to vector<128x64xbf16>
    %c8 = arith.constant 8 : index
    %c0_38 = arith.constant 0 : index
    %c0_39 = arith.constant 0 : index
    %64 = vector.load %arg5[%c8, %c0_38, %c0_39] : memref<9x64x64xbf16, #tpu.memory_space<vmem>>, vector<1x64x64xbf16>
    %65 = vector.shape_cast %64 : vector<1x64x64xbf16> to vector<64x64xbf16>
    %cst_40 = arith.constant dense<0.000000e+00> : vector<128x64xf32>
    %66 = tpu.matmul %63, %65, %cst_40 {dimension_numbers = #tpu.dot_dimension_numbers<[1], [0], [0], [1], [0, 0, 1, 1], [], []>} : vector<128x64xbf16>, vector<64x64xbf16>, vector<128x64xf32> -> vector<128x64xf32>
    %67 = arith.addf %61, %66 : vector<128x64xf32>
    %c0_41 = arith.constant 0 : index
    %c0_42 = arith.constant 0 : index
    %68 = vector.load %arg6[%c0_41, %c0_42] : memref<1x64xf32, #tpu.memory_space<vmem>>, vector<1x64xf32>
    %69 = vector.broadcast %68 : vector<1x64xf32> to vector<128x64xf32>
    %70 = arith.addf %67, %69 : vector<128x64xf32>
    %cst_43 = arith.constant 0.000000e+00 : f32
    %71 = vector.broadcast %cst_43 : f32 to vector<128x64xf32>
    %72 = arith.cmpf ogt, %70, %71 : vector<128x64xf32>
    %cst_44 = arith.constant 0.00999999977 : f32
    %73 = vector.broadcast %cst_44 : f32 to vector<128x64xf32>
    %74 = arith.mulf %73, %70 : vector<128x64xf32>
    %75 = arith.select %72, %70, %74 : vector<128x64xi1>, vector<128x64xf32>
    %76 = vector.shape_cast %75 : vector<128x64xf32> to vector<8x16x64xf32>
    %c0_45 = arith.constant 0 : index
    %c0_46 = arith.constant 0 : index
    %c0_47 = arith.constant 0 : index
    %c0_48 = arith.constant 0 : index
    %77 = vector.load %arg7[%c0_45, %c0_46, %c0_47, %c0_48] : memref<1x8x16x64xf32, #tpu.memory_space<vmem>>, vector<1x8x16x64xf32>
    %78 = vector.shape_cast %77 : vector<1x8x16x64xf32> to vector<8x16x64xf32>
    %79 = vector.shape_cast %76 : vector<8x16x64xf32> to vector<1x8x16x64xf32>
    tpu.vector_store %arg7[%c0_45, %c0_46, %c0_47, %c0_48], %79 {strides = array<i32>} : memref<1x8x16x64xf32, #tpu.memory_space<vmem>>, vector<1x8x16x64xf32>,
    return
  }
  func.func @transform_0(%arg0: i32, %arg1: i32) -> (i32, i32, i32, i32) {
    %c0_i32 = arith.constant 0 : i32
    %c0_i32_0 = arith.constant 0 : i32
    %c0_i32_1 = arith.constant 0 : i32
    return %arg0, %arg1, %c0_i32, %c0_i32_0 : i32, i32, i32, i32
  }
  func.func @transform_1(%arg0: i32, %arg1: i32) -> (i32, i32, i32, i32) {
    %c8_i32 = arith.constant 8 : i32
    %0 = arith.muli %arg1, %c8_i32 : i32
    %c1_i32 = arith.constant 1 : i32
    %1 = arith.subi %0, %c1_i32 : i32
    %c0_i32 = arith.constant 0 : i32
    %2 = arith.maxsi %1, %c0_i32 : i32
    %c0_i32_0 = arith.constant 0 : i32
    %c0_i32_1 = arith.constant 0 : i32
    %c0_i32_2 = arith.constant 0 : i32
    return %arg0, %2, %c0_i32_0, %c0_i32_1 : i32, i32, i32, i32
  }
  func.func @transform_2(%arg0: i32, %arg1: i32) -> (i32, i32, i32, i32) {
    %c8_i32 = arith.constant 8 : i32
    %0 = arith.muli %arg1, %c8_i32 : i32
    %c8_i32_0 = arith.constant 8 : i32
    %1 = arith.addi %0, %c8_i32_0 : i32
    %c15_i32 = arith.constant 15 : i32
    %2 = arith.minsi %1, %c15_i32 : i32
    %c0_i32 = arith.constant 0 : i32
    %c0_i32_1 = arith.constant 0 : i32
    %c0_i32_2 = arith.constant 0 : i32
    return %arg0, %2, %c0_i32, %c0_i32_1 : i32, i32, i32, i32
  }
  func.func @transform_3(%arg0: i32, %arg1: i32) -> (i32, i32, i32) {
    %c0_i32 = arith.constant 0 : i32
    %c0_i32_0 = arith.constant 0 : i32
    %c0_i32_1 = arith.constant 0 : i32
    %c0_i32_2 = arith.constant 0 : i32
    return %c0_i32, %c0_i32_0, %c0_i32_1 : i32, i32, i32
  }
  func.func @transform_4(%arg0: i32, %arg1: i32) -> (i32, i32) {
    %c0_i32 = arith.constant 0 : i32
    %c0_i32_0 = arith.constant 0 : i32
    %c0_i32_1 = arith.constant 0 : i32
    return %c0_i32, %c0_i32_0 : i32, i32
  }
  func.func @transform_5(%arg0: i32, %arg1: i32) -> (i32, i32, i32, i32) {
    %c0_i32 = arith.constant 0 : i32
    %c0_i32_0 = arith.constant 0 : i32
    %c0_i32_1 = arith.constant 0 : i32
    return %arg0, %arg1, %c0_i32, %c0_i32_0 : i32, i32, i32, i32
  }
}

</mosaic_0001>

<llo_original>
// kernel: tpu_custom_call.1
$region0: #{tpu_custom_call.1}
  #allocation0 [shape = 'u32[]', space=smem, size = 0x4, offset = 0x4, fixed_abs, tag = 'smem constant byte address 0x4 - core index']
  #allocation1 [shape = 'u32[72,128]{1,0:T(1,128)}', space=vmem, size = 0x9000, scoped, tag = 'internal scratch']
  %s0 = inlined_call_operand.hbm [shape: bf16[1,16,16,64], index: 0, kind: input, shape index: {}]
  %s1 = inlined_call_operand.hbm [shape: bf16[1,16,16,64], index: 1, kind: input, shape index: {}]
  %s2 = inlined_call_operand.hbm [shape: bf16[1,16,16,64], index: 2, kind: input, shape index: {}]
  %s3 = inlined_call_operand.hbm [shape: bf16[9,64,64], index: 3, kind: input, shape index: {}]
  %s4 = inlined_call_operand.vmem [shape: f32[1,64], index: 4, kind: input, shape index: {}]
  %s5 = inlined_call_operand.hbm [shape: f32[1,16,16,64], index: 5, kind: output, shape index: {}]
  %s6 = sld [smem:[#allocation0]]
  $region69: #{tpu_custom_call.1} parent=0
    _
  %s8 = ssub.s32 1, %s6
  %s9 = scalar_select 0, %s8, %s6
  $region1: #{tpu_custom_call.1} parent=0
    #allocation2 [shape = 'u8[65536]{0}', space=vmem, size = 0x10000, scoped, tag = 'input window, operand 0']
    #allocation3 [shape = 's32[2]{0}', space=sflag, size = 0x8, scoped, tag = 'scoped memory for tpu_custom_call.1']
    #allocation4 [shape = 's32[2]{0}', space=sflag, size = 0x8, scoped, tag = 'scoped memory for tpu_custom_call.1']
    #allocation5 [shape = 'u8[8192]{0}', space=vmem, size = 0x2000, scoped, tag = 'input window, operand 1']
    #allocation6 [shape = 's32[2]{0}', space=sflag, size = 0x8, scoped, tag = 'scoped memory for tpu_custom_call.1']
    #allocation7 [shape = 'u8[8192]{0}', space=vmem, size = 0x2000, scoped, tag = 'input window, operand 2']
    #allocation8 [shape = 'u8[147456]{0}', space=vmem, size = 0x24000, scoped, tag = 'input window, operand 3, single buffered']
    #allocation9 [shape = 's32[1]{0}', space=sflag, size = 0x4, scoped, tag = 'scoped memory for tpu_custom_call.1']
    #allocation10 [shape = 'u8[131072]{0}', space=vmem, size = 0x20000, scoped, tag = 'output window, operand 0']
    %10 = vsyncpa [#allocation3], 0
    %s11 = scalar_lea.sflag [#allocation3], 1
    %12 = vsyncpa %s11, 0
    %13 = vsyncpa [#allocation6], 0
    %s14 = scalar_lea.sflag [#allocation6], 1
    %15 = vsyncpa %s14, 0
    %16 = vsyncpa [#allocation9], 0
    %17 = vsyncpa [#allocation4], 0
    %s18 = scalar_lea.sflag [#allocation4], 1
    %19 = vsyncpa %s18, 0
    loop: start=0, step=1, limit=4
    $region2: #{tpu_custom_call.1} parent=1 // loop_pre_header
      _
    $region3: #{tpu_custom_call.1} parent=1 // loop_header
      %s21 = sphi 0, %s25
      %p22 = scmp.ge.s32.totalorder %s21, 4
      %s28 = sphi 0, %s40
      %s29 = sphi 0, %s36
      %s30 = sphi 0, %s28
      %s31 = sphi 0, %s29
      %s32 = sphi 0, %s30
      %s33 = sphi 0, %s31
      %s45 = sphi 0, %s47
      %s48 = sphi 0, %s45
      %s49 = sphi 0, %s48
      %s65 = sphi 0, %s49
      %s81 = sphi 0, %s83
      %s84 = sphi 0, %s81
      %s85 = sphi 0, %s84
      %s101 = sphi 0, %s85
      %s117 = sphi 0, %s119
      %s120 = sphi 0, %s117
      %s121 = sphi 0, %s120
      %s137 = sphi 0, %s121
      %s141 = sphi 0, %s141
      %s143 = sphi 0, %s141
      %s144 = sphi 0, %s143
      %s158 = sphi 0, %s144
      %s162 = sphi 0, %s162
      %s164 = sphi 0, %s162
      %s165 = sphi 0, %s164
      %s179 = sphi 0, %s165
      %s187 = sphi 0, %s189
      %s190 = sphi 0, %s187
      %s191 = sphi 0, %s190
      %s207 = sphi 0, %s191
    $region4: #{tpu_custom_call.1} parent=1 // loop_header_branch
      %24 = sbr.rel (%p22) target = $region8
    $region5: #{tpu_custom_call.1} parent=1 // loop_body
      %s26 = ssub.s32 %s21, 1
      %s27 = ssub.s32 %s21, 2
      %s34 = sadd.s32 1, %s29
      %p35 = scmp.ge.s32.totalorder %s34, 2
      %s36 = scalar_select %p35, 0, %s34
      %s37 = sadd.s32 1, %s28
      %s38 = scalar_select %p35, %s37, %s28
      %p39 = scmp.ge.s32.totalorder %s38, 1
      %s40 = scalar_select %p39, 0, %s38
      %s41 = ssub.s32 %s28, %s40
      %s42 = ssub.s32 %s29, %s36
      %s43 = sor.u32 %s41, %s42
      %p44 = scmp.eq.s32.totalorder %s43, 0
      %s46 = sadd.s32 %s45, 1
      %s47 = scalar_select %p44, %s45, %s46
      %p50 = pneg %p44
      %p51 = scmp.eq.s32.totalorder %s21, 1
      %p52 = por %p50, %p51
      %p53 = scmp.ne.s32.totalorder %s45, %s48
      %p54 = scmp.eq.s32.totalorder %s21, 0
      %p55 = por %p53, %p54
      %p56 = scmp.ne.s32.totalorder %s45, %s48
      %p57 = scmp.eq.s32.totalorder %s26, 1
      %p58 = por %p56, %p57
      %p59 = scmp.ne.s32.totalorder %s48, %s49
      %p60 = scmp.eq.s32.totalorder %s26, 0
      %p61 = por %p59, %p60
      %p62 = scmp.ne.s32.totalorder %s48, %s49
      %p63 = scmp.eq.s32.totalorder %s27, 1
      %p64 = por %p62, %p63
      %p66 = scmp.ne.s32.totalorder %s49, %s65
      %p67 = scmp.eq.s32.totalorder %s27, 0
      %p68 = por %p66, %p67
      %s69 = smul.u32 %s29, 8
      %s70 = ssub.s32 %s69, 1
      %p71 = scmp.gt.s32.totalorder %s70, 0
      %s72 = scalar_select %p71, %s70, 0
      %s73 = smul.u32 %s36, 8
      %s74 = ssub.s32 %s73, 1
      %p75 = scmp.gt.s32.totalorder %s74, 0
      %s76 = scalar_select %p75, %s74, 0
      %s77 = ssub.s32 %s28, %s40
      %s78 = ssub.s32 %s72, %s76
      %s79 = sor.u32 %s77, %s78
      %p80 = scmp.eq.s32.totalorder %s79, 0
      %s82 = sadd.s32 %s81, 1
      %s83 = scalar_select %p80, %s81, %s82
      %p86 = pneg %p80
      %p87 = scmp.eq.s32.totalorder %s21, 1
      %p88 = por %p86, %p87
      %p89 = scmp.ne.s32.totalorder %s81, %s84
      %p90 = scmp.eq.s32.totalorder %s21, 0
      %p91 = por %p89, %p90
      %p92 = scmp.ne.s32.totalorder %s81, %s84
      %p93 = scmp.eq.s32.totalorder %s26, 1
      %p94 = por %p92, %p93
      %p95 = scmp.ne.s32.totalorder %s84, %s85
      %p96 = scmp.eq.s32.totalorder %s26, 0
      %p97 = por %p95, %p96
      %p98 = scmp.ne.s32.totalorder %s84, %s85
      %p99 = scmp.eq.s32.totalorder %s27, 1
      %p100 = por %p98, %p99
      %p102 = scmp.ne.s32.totalorder %s85, %s101
      %p103 = scmp.eq.s32.totalorder %s27, 0
      %p104 = por %p102, %p103
      %s105 = smul.u32 %s29, 8
      %s106 = sadd.s32 %s105, 8
      %p107 = scmp.lt.s32.totalorder %s106, 15
      %s108 = scalar_select %p107, %s106, 15
      %s109 = smul.u32 %s36, 8
      %s110 = sadd.s32 %s109, 8
      %p111 = scmp.lt.s32.totalorder %s110, 15
      %s112 = scalar_select %p111, %s110, 15
      %s113 = ssub.s32 %s28, %s40
      %s114 = ssub.s32 %s108, %s112
      %s115 = sor.u32 %s113, %s114
      %p116 = scmp.eq.s32.totalorder %s115, 0
      %s118 = sadd.s32 %s117, 1
      %s119 = scalar_select %p116, %s117, %s118
      %p122 = pneg %p116
      %p123 = scmp.eq.s32.totalorder %s21, 1
      %p124 = por %p122, %p123
      %p125 = scmp.ne.s32.totalorder %s117, %s120
      %p126 = scmp.eq.s32.totalorder %s21, 0
      %p127 = por %p125, %p126
      %p128 = scmp.ne.s32.totalorder %s117, %s120
      %p129 = scmp.eq.s32.totalorder %s26, 1
      %p130 = por %p128, %p129
      %p131 = scmp.ne.s32.totalorder %s120, %s121
      %p132 = scmp.eq.s32.totalorder %s26, 0
      %p133 = por %p131, %p132
      %p134 = scmp.ne.s32.totalorder %s120, %s121
      %p135 = scmp.eq.s32.totalorder %s27, 1
      %p136 = por %p134, %p135
      %p138 = scmp.ne.s32.totalorder %s121, %s137
      %p139 = scmp.eq.s32.totalorder %s27, 0
      %p140 = por %p138, %p139
      %s142 = sadd.s32 %s141, 1
      %p145 = scmp.eq.s32.totalorder %s21, 1
      %p146 = scmp.ne.s32.totalorder %s141, %s143
      %p147 = scmp.eq.s32.totalorder %s21, 0
      %p148 = por %p146, %p147
      %p149 = scmp.ne.s32.totalorder %s141, %s143
      %p150 = scmp.eq.s32.totalorder %s26, 1
      %p151 = por %p149, %p150
      %p152 = scmp.ne.s32.totalorder %s143, %s144
      %p153 = scmp.eq.s32.totalorder %s26, 0
      %p154 = por %p152, %p153
      %p155 = scmp.ne.s32.totalorder %s143, %s144
      %p156 = scmp.eq.s32.totalorder %s27, 1
      %p157 = por %p155, %p156
      %p159 = scmp.ne.s32.totalorder %s144, %s158
      %p160 = scmp.eq.s32.totalorder %s27, 0
      %p161 = por %p159, %p160
      %s163 = sadd.s32 %s162, 1
      %p166 = scmp.eq.s32.totalorder %s21, 1
      %p167 = scmp.ne.s32.totalorder %s162, %s164
      %p168 = scmp.eq.s32.totalorder %s21, 0
      %p169 = por %p167, %p168
      %p170 = scmp.ne.s32.totalorder %s162, %s164
      %p171 = scmp.eq.s32.totalorder %s26, 1
      %p172 = por %p170, %p171
      %p173 = scmp.ne.s32.totalorder %s164, %s165
      %p174 = scmp.eq.s32.totalorder %s26, 0
      %p175 = por %p173, %p174
      %p176 = scmp.ne.s32.totalorder %s164, %s165
      %p177 = scmp.eq.s32.totalorder %s27, 1
      %p178 = por %p176, %p177
      %p180 = scmp.ne.s32.totalorder %s165, %s179
      %p181 = scmp.eq.s32.totalorder %s27, 0
      %p182 = por %p180, %p181
      %s183 = ssub.s32 %s28, %s40
      %s184 = ssub.s32 %s29, %s36
      %s185 = sor.u32 %s183, %s184
      %p186 = scmp.eq.s32.totalorder %s185, 0
      %s188 = sadd.s32 %s187, 1
      %s189 = scalar_select %p186, %s187, %s188
      %p192 = pneg %p186
      %p193 = scmp.eq.s32.totalorder %s21, 1
      %p194 = por %p192, %p193
      %p195 = scmp.ne.s32.totalorder %s187, %s190
      %p196 = scmp.eq.s32.totalorder %s21, 0
      %p197 = por %p195, %p196
      %p198 = scmp.ne.s32.totalorder %s187, %s190
      %p199 = scmp.eq.s32.totalorder %s26, 1
      %p200 = por %p198, %p199
      %p201 = scmp.ne.s32.totalorder %s190, %s191
      %p202 = scmp.eq.s32.totalorder %s26, 0
      %p203 = por %p201, %p202
      %p204 = scmp.ne.s32.totalorder %s190, %s191
      %p205 = scmp.eq.s32.totalorder %s27, 1
      %p206 = por %p204, %p205
      %p208 = scmp.ne.s32.totalorder %s191, %s207
      %p209 = scmp.eq.s32.totalorder %s27, 0
      %p210 = por %p208, %p209
      %p211 = scmp.le.s32.totalorder 1, %s21
      %p212 = scmp.lt.s32.totalorder %s21, 3
      %p213 = pnand %p211, %p212
      %p214 = pneg %p213
      // Predicated region
      $region9: #{tpu_custom_call.1} parent=5 // pred_check
        _
      $region10: #{tpu_custom_call.1} parent=5 // pred_check_branch
        %216 = sbr.rel (%p213) target = $region12
      $region11: #{tpu_custom_call.1} parent=5 // pred_region
        %s217 = ssub.s32 %s21, 1
        // Predicated region
        $region13: #{tpu_custom_call.1} parent=11 // pred_check
          %p218 = pneg %p154
        $region14: #{tpu_custom_call.1} parent=11 // pred_check_branch
          %220 = sbr.rel (%p218) target = $region16
        $region15: #{tpu_custom_call.1} parent=11 // pred_region
          %222 = vsyncadd [#allocation9], 0
          %s223 = sshll.u32 %s3, 4
          %s224 = int_to_ptr.hbm [resolvable:$true] %s223
          %s225 = sshll.u32 [#allocation8], 4
          %s226 = int_to_ptr.vmem [resolvable:$true] %s225
          %231 = dma.hbm_to_vmem [thread:$0]  %s224, 4608, %s226, [#allocation9], 64, 64, 4
        $region16: #{tpu_custom_call.1} parent=11 // pred_fallthru
          _
        // Predicated region
        $region17: #{tpu_custom_call.1} parent=11 // pred_check
          %p232 = pneg %p175
        $region18: #{tpu_custom_call.1} parent=11 // pred_check_branch
          %234 = sbr.rel (%p232) target = $region20
        $region19: #{tpu_custom_call.1} parent=11 // pred_region
          _
        $region20: #{tpu_custom_call.1} parent=11 // pred_fallthru
          _
      $region12: #{tpu_custom_call.1} parent=5 // pred_fallthru
        _
      %p235 = scmp.lt.s32.totalorder %s21, 2
      // Predicated region
      $region21: #{tpu_custom_call.1} parent=5 // pred_check
        %p236 = pneg %p235
      $region22: #{tpu_custom_call.1} parent=5 // pred_check_branch
        %238 = sbr.rel (%p236) target = $region24
      $region23: #{tpu_custom_call.1} parent=5 // pred_region
        // Predicated region
        $region25: #{tpu_custom_call.1} parent=23 // pred_check
          %p239 = pneg %p55
        $region26: #{tpu_custom_call.1} parent=23 // pred_check_branch
          %241 = sbr.rel (%p239) target = $region28
        $region27: #{tpu_custom_call.1} parent=23 // pred_region
          %s242 = sand.u32 %s45, 1
          %s243 = scalar_lea.sflag [#allocation3], %s242
          %s244 = sand.u32 %s45, 1
          %s245 = smul.addr %s244, 64
          %s246 = scalar_lea.vmem [#allocation2], %s245
          %s247 = smul.u32 8, %s29
          %249 = vsyncadd %s243, 0
          %s250 = smul.addr %s247, 2
          %s251 = smul.addr %s28, 32
          %s252 = sadd.s32 %s250, %s251
          %s253 = smul.addr %s252, 4
          %s254 = scalar_lea.hbm %s0, %s253
          %s255 = sshll.u32 %s254, 4
          %s256 = int_to_ptr.hbm [resolvable:$true] %s255
          %s257 = sshll.u32 %s246, 4
          %s258 = int_to_ptr.vmem [resolvable:$true] %s257
          %263 = dma.hbm_to_vmem [thread:$0]  %s256, 1024, %s258, %s243, 64, 64, 4
        $region28: #{tpu_custom_call.1} parent=23 // pred_fallthru
          _
        // Predicated region
        $region29: #{tpu_custom_call.1} parent=23 // pred_check
          %p264 = pneg %p91
        $region30: #{tpu_custom_call.1} parent=23 // pred_check_branch
          %266 = sbr.rel (%p264) target = $region32
        $region31: #{tpu_custom_call.1} parent=23 // pred_region
          %s267 = sand.u32 %s21, 1
          %s268 = scalar_lea.sflag [#allocation6], %s267
          %s269 = sand.u32 %s81, 1
          %s270 = smul.addr %s269, 8
          %s271 = scalar_lea.vmem [#allocation5], %s270
          %s272 = smul.u32 %s29, 8
          %s273 = ssub.s32 %s272, 1
          %p274 = scmp.gt.s32.totalorder %s273, 0
          %s275 = scalar_select %p274, %s273, 0
          %277 = vsyncadd %s268, 0
          %s278 = smul.addr %s275, 2
          %s279 = smul.addr %s28, 32
          %s280 = sadd.s32 %s278, %s279
          %s281 = smul.addr %s280, 4
          %s282 = scalar_lea.hbm %s1, %s281
          %s283 = sshll.u32 %s282, 4
          %s284 = int_to_ptr.hbm [resolvable:$true] %s283
          %s285 = sshll.u32 %s271, 4
          %s286 = int_to_ptr.vmem [resolvable:$true] %s285
          %291 = dma.hbm_to_vmem [thread:$0]  %s284, 128, %s286, %s268, 64, 64, 4
        $region32: #{tpu_custom_call.1} parent=23 // pred_fallthru
          _
        // Predicated region
        $region33: #{tpu_custom_call.1} parent=23 // pred_check
          %p292 = pneg %p127
        $region34: #{tpu_custom_call.1} parent=23 // pred_check_branch
          %294 = sbr.rel (%p292) target = $region36
        $region35: #{tpu_custom_call.1} parent=23 // pred_region
          %s295 = sand.u32 %s21, 1
          %s296 = scalar_lea.sflag [#allocation6], %s295
          %s297 = sand.u32 %s117, 1
          %s298 = smul.addr %s297, 8
          %s299 = scalar_lea.vmem [#allocation7], %s298
          %s300 = smul.u32 %s29, 8
          %s301 = sadd.s32 %s300, 8
          %p302 = scmp.lt.s32.totalorder %s301, 15
          %s303 = scalar_select %p302, %s301, 15
          %305 = vsyncadd %s296, 0
          %s306 = smul.addr %s303, 2
          %s307 = smul.addr %s28, 32
          %s308 = sadd.s32 %s306, %s307
          %s309 = smul.addr %s308, 4
          %s310 = scalar_lea.hbm %s2, %s309
          %s311 = sshll.u32 %s310, 4
          %s312 = int_to_ptr.hbm [resolvable:$true] %s311
          %s313 = sshll.u32 %s299, 4
          %s314 = int_to_ptr.vmem [resolvable:$true] %s313
          %319 = dma.hbm_to_vmem [thread:$0]  %s312, 128, %s314, %s296, 64, 64, 4
        $region36: #{tpu_custom_call.1} parent=23 // pred_fallthru
          _
      $region24: #{tpu_custom_call.1} parent=5 // pred_fallthru
        _
      %p320 = scmp.le.s32.totalorder 1, %s21
      %p321 = scmp.lt.s32.totalorder %s21, 3
      %p322 = pnand %p320, %p321
      %p323 = pneg %p322
      // Predicated region
      $region37: #{tpu_custom_call.1} parent=5 // pred_check
        _
      $region38: #{tpu_custom_call.1} parent=5 // pred_check_branch
        %325 = sbr.rel (%p322) target = $region40
      $region39: #{tpu_custom_call.1} parent=5 // pred_region
        %s326 = ssub.s32 %s21, 1
        %s327 = sand.u32 %s48, 1
        %s328 = scalar_lea.sflag [#allocation3], %s327
        %s329 = sand.u32 %s48, 1
        %s330 = smul.addr %s329, 64
        %s331 = scalar_lea.vmem [#allocation2], %s330
        // Predicated region
        $region41: #{tpu_custom_call.1} parent=39 // pred_check
          %p332 = pneg %p61
        $region42: #{tpu_custom_call.1} parent=39 // pred_check_branch
          %334 = sbr.rel (%p332) target = $region44
        $region43: #{tpu_custom_call.1} parent=39 // pred_region
          %336 = dma.done %s328, 1024
        $region44: #{tpu_custom_call.1} parent=39 // pred_fallthru
          _
        %s337 = sand.u32 %s26, 1
        %s338 = scalar_lea.sflag [#allocation6], %s337
        %s339 = sand.u32 %s84, 1
        %s340 = smul.addr %s339, 8
        %s341 = scalar_lea.vmem [#allocation5], %s340
        // Predicated region
        $region45: #{tpu_custom_call.1} parent=39 // pred_check
          %p342 = pneg %p97
        $region46: #{tpu_custom_call.1} parent=39 // pred_check_branch
          %344 = sbr.rel (%p342) target = $region48
        $region47: #{tpu_custom_call.1} parent=39 // pred_region
          %346 = dma.done %s338, 128
        $region48: #{tpu_custom_call.1} parent=39 // pred_fallthru
          _
        %s347 = sand.u32 %s26, 1
        %s348 = scalar_lea.sflag [#allocation6], %s347
        %s349 = sand.u32 %s120, 1
        %s350 = smul.addr %s349, 8
        %s351 = scalar_lea.vmem [#allocation7], %s350
        // Predicated region
        $region49: #{tpu_custom_call.1} parent=39 // pred_check
          %p352 = pneg %p133
        $region50: #{tpu_custom_call.1} parent=39 // pred_check_branch
          %354 = sbr.rel (%p352) target = $region52
        $region51: #{tpu_custom_call.1} parent=39 // pred_region
          %356 = dma.done %s348, 128
        $region52: #{tpu_custom_call.1} parent=39 // pred_fallthru
          _
        // Predicated region
        $region53: #{tpu_custom_call.1} parent=39 // pred_check
          %p357 = pneg %p154
        $region54: #{tpu_custom_call.1} parent=39 // pred_check_branch
          %359 = sbr.rel (%p357) target = $region56
        $region55: #{tpu_custom_call.1} parent=39 // pred_region
          %361 = dma.done [#allocation9], 4608
        $region56: #{tpu_custom_call.1} parent=39 // pred_fallthru
          _
        %s362 = sand.u32 %s48, 1
        %s363 = scalar_lea.sflag [#allocation3], %s362
        %s364 = sand.u32 %s48, 1
        %s365 = smul.addr %s364, 64
        %s366 = scalar_lea.vmem [#allocation2], %s365
        %p367 = pneg %p61
        %p368 = pneg %p58
        %s369 = sand.u32 %s26, 1
        %s370 = scalar_lea.sflag [#allocation6], %s369
        %s371 = sand.u32 %s84, 1
        %s372 = smul.addr %s371, 8
        %s373 = scalar_lea.vmem [#allocation5], %s372
        %p374 = pneg %p97
        %p375 = pneg %p94
        %s376 = sand.u32 %s26, 1
        %s377 = scalar_lea.sflag [#allocation6], %s376
        %s378 = sand.u32 %s120, 1
        %s379 = smul.addr %s378, 8
        %s380 = scalar_lea.vmem [#allocation7], %s379
        %p381 = pneg %p133
        %p382 = pneg %p130
        %p383 = pneg %p154
        %p384 = pneg %p151
        %p385 = pneg %p175
        %p386 = pneg %p172
        %p387 = pneg %p203
        %p388 = pneg %p200
        %s389 = sand.u32 %s190, 1
        %s390 = scalar_lea.sflag [#allocation4], %s389
        %s391 = sand.u32 %s190, 1
        %s392 = smul.addr %s391, 128
        %s393 = scalar_lea.vmem [#allocation10], %s392
        %s394 = smul.u32 8, %s31
        %s395 = smul.u32 %s31, 8
        %s396 = ssub.s32 %s395, 1
        %p397 = scmp.gt.s32.totalorder %s396, 0
        %s398 = scalar_select %p397, %s396, 0
        %s399 = smul.u32 %s31, 8
        %s400 = sadd.s32 %s399, 8
        %p401 = scmp.lt.s32.totalorder %s400, 15
        %s402 = scalar_select %p401, %s400, 15
        %s403 = smul.u32 8, %s31
        %v405 = vld [vmem:[%s331] sm:$0xf]
        %v406 = vld [vmem:[%s331 + $0x4] sm:$0xf]
        %v407 = vld [vmem:[%s331 + $0x8] sm:$0xf]
        %v408 = vld [vmem:[%s331 + $0xc] sm:$0xf]
        %v409 = vld [vmem:[%s331 + $0x10] sm:$0xf]
        %v410 = vld [vmem:[%s331 + $0x14] sm:$0xf]
        %v411 = vld [vmem:[%s331 + $0x18] sm:$0xf]
        %v412 = vld [vmem:[%s331 + $0x1c] sm:$0xf]
        %v413 = vld [vmem:[%s331 + $0x20] sm:$0xf]
        %v414 = vld [vmem:[%s331 + $0x24] sm:$0xf]
        %v415 = vld [vmem:[%s331 + $0x28] sm:$0xf]
        %v416 = vld [vmem:[%s331 + $0x2c] sm:$0xf]
        %v417 = vld [vmem:[%s331 + $0x30] sm:$0xf]
        %v418 = vld [vmem:[%s331 + $0x34] sm:$0xf]
        %v419 = vld [vmem:[%s331 + $0x38] sm:$0xf]
        %v420 = vld [vmem:[%s331 + $0x3c] sm:$0xf]
        %v421 = vld [vmem:[%s341] sm:$0xf]
        %v422 = vld [vmem:[%s341 + $0x4] sm:$0xf]
        %v423 = vld [vmem:[%s351] sm:$0xf]
        %v424 = vld [vmem:[%s351 + $0x4] sm:$0xf]
        %p425 = scmp.eq.s32.totalorder %s31, 0
        %s426 = scalar_select %p425, 1, 0
        %v427 = vstv %s426
        %vm428 = vcmp.eq.s32.totalorder %v427, 1
        %v429 = vsel %vm428, 0, %v421
        %v430 = vsel %vm428, 0, %v422
        %p431 = scmp.eq.s32.totalorder %s31, 1
        %s432 = scalar_select %p431, 1, 0
        %v433 = vstv %s432
        %vm434 = vcmp.eq.s32.totalorder %v433, 1
        %v435 = vsel %vm434, 0, %v423
        %v436 = vsel %vm434, 0, %v424
        %v457 = vunpack.c.l.b16 %v429
        %v458 = vunpack.c.l.b16 %v430
        %v459 = vunpack.c.l.b16 %v405
        %v460 = vunpack.c.l.b16 %v406
        %v461 = vunpack.c.l.b16 %v407
        %v462 = vunpack.c.l.b16 %v408
        %v463 = vunpack.c.l.b16 %v409
        %v464 = vunpack.c.l.b16 %v410
        %v465 = vunpack.c.l.b16 %v411
        %v466 = vunpack.c.l.b16 %v412
        %v467 = vunpack.c.l.b16 %v413
        %v468 = vunpack.c.l.b16 %v414
        %v469 = vunpack.c.l.b16 %v415
        %v470 = vunpack.c.l.b16 %v416
        %v471 = vunpack.c.l.b16 %v417
        %v472 = vunpack.c.l.b16 %v418
        %v473 = vunpack.c.l.b16 %v419
        %v474 = vunpack.c.l.b16 %v420
        %v475 = vunpack.c.l.b16 %v435
        %v476 = vunpack.c.l.b16 %v436
        %v477 = vpack.c.b16 %v458, %v457
        %v478 = vpack.c.b16 %v460, %v459
        %v479 = vpack.c.b16 %v462, %v461
        %v480 = vpack.c.b16 %v464, %v463
        %v481 = vpack.c.b16 %v466, %v465
        %v482 = vpack.c.b16 %v468, %v467
        %v483 = vpack.c.b16 %v470, %v469
        %v484 = vpack.c.b16 %v472, %v471
        %v485 = vpack.c.b16 %v474, %v473
        %v486 = vpack.c.b16 %v476, %v475
        %v488 = vshrl.u32 %v477, 16
        %v490 = vrot.slane %v488, 7
        %v491 = vshll.u32 %v477, 16
        %v493 = vor.u32 %v490, %v491
        %v495 = vshrl.u32 %v478, 16
        %v497 = vrot.slane %v495, 7
        %v498 = vshll.u32 %v478, 16
        %v500 = vor.u32 %v497, %v498
        %v502 = vshrl.u32 %v479, 16
        %v504 = vrot.slane %v502, 7
        %v505 = vshll.u32 %v479, 16
        %v507 = vor.u32 %v504, %v505
        %v509 = vshrl.u32 %v480, 16
        %v511 = vrot.slane %v509, 7
        %v512 = vshll.u32 %v480, 16
        %v514 = vor.u32 %v511, %v512
        %v516 = vshrl.u32 %v481, 16
        %v518 = vrot.slane %v516, 7
        %v519 = vshll.u32 %v481, 16
        %v521 = vor.u32 %v518, %v519
        %v523 = vshrl.u32 %v482, 16
        %v525 = vrot.slane %v523, 7
        %v526 = vshll.u32 %v482, 16
        %v528 = vor.u32 %v525, %v526
        %v530 = vshrl.u32 %v483, 16
        %v532 = vrot.slane %v530, 7
        %v533 = vshll.u32 %v483, 16
        %v535 = vor.u32 %v532, %v533
        %v537 = vshrl.u32 %v484, 16
        %v539 = vrot.slane %v537, 7
        %v540 = vshll.u32 %v484, 16
        %v542 = vor.u32 %v539, %v540
        %v544 = vshrl.u32 %v485, 16
        %v546 = vrot.slane %v544, 7
        %v547 = vshll.u32 %v485, 16
        %v549 = vor.u32 %v546, %v547
        %v551 = vshrl.u32 %v486, 16
        %v553 = vrot.slane %v551, 7
        %v554 = vshll.u32 %v486, 16
        %v556 = vor.u32 %v553, %v554
        %vm577 = vcmask 1040384
        %vm578 = vsmask.f32 256
        %vm579 = vmand %vm577, %vm578
        %v580 = vsel %vm579, 0, %v493
        %v581 = vsel %vm579, 0, %v500
        %v582 = vsel %vm579, 0, %v507
        %v583 = vsel %vm579, 0, %v514
        %v584 = vsel %vm579, 0, %v521
        %v585 = vsel %vm579, 0, %v528
        %v586 = vsel %vm579, 0, %v535
        %v587 = vsel %vm579, 0, %v542
        %v588 = vsel %vm579, 0, %v549
        %v589 = vsel %vm579, 0, %v556
        %v590 = vsel %vm579, %v490, 0
        %v591 = vsel %vm579, %v497, 0
        %v592 = vsel %vm579, %v504, 0
        %v593 = vsel %vm579, %v511, 0
        %v594 = vsel %vm579, %v518, 0
        %v595 = vsel %vm579, %v525, 0
        %v596 = vsel %vm579, %v532, 0
        %v597 = vsel %vm579, %v539, 0
        %v598 = vsel %vm579, %v546, 0
        %v599 = vsel %vm579, %v553, 0
        %v600 = vld [vmem:[#allocation8] sm:$0xf]
        %v601 = vld [vmem:[#allocation8 + $0x4] sm:$0xf]
        %v602 = vld [vmem:[#allocation8 + $0x8] sm:$0xf]
        %v603 = vld [vmem:[#allocation8 + $0xc] sm:$0xf]
        %v604 = vld [vmem:[#allocation8 + $0x10] sm:$0xf]
        %v605 = vld [vmem:[#allocation8 + $0x14] sm:$0xf]
        %v606 = vld [vmem:[#allocation8 + $0x18] sm:$0xf]
        %v607 = vld [vmem:[#allocation8 + $0x1c] sm:$0xf]
        %vm608 = vsmask.f32 7424
        %v610 = vshrl.u32 %v580, 16
        %v612 = vshll.u32 %v580, 16
        %v614 = vrot.slane %v612, 1
        %v615 = vor.u32 %v610, %v614
        %v617 = vshll.u32 %v590, 16
        %v619 = vrot.slane %v617, 1
        %v620 = vsel %vm608, %v615, %v619
        %v622 = vshrl.u32 %v581, 16
        %v624 = vshll.u32 %v581, 16
        %v626 = vrot.slane %v624, 1
        %v627 = vor.u32 %v622, %v626
        %v629 = vshll.u32 %v591, 16
        %v631 = vrot.slane %v629, 1
        %v632 = vsel %vm608, %v627, %v631
        %v634 = vshrl.u32 %v582, 16
        %v636 = vshll.u32 %v582, 16
        %v638 = vrot.slane %v636, 1
        %v639 = vor.u32 %v634, %v638
        %v641 = vshll.u32 %v592, 16
        %v643 = vrot.slane %v641, 1
        %v644 = vsel %vm608, %v639, %v643
        %v646 = vshrl.u32 %v583, 16
        %v648 = vshll.u32 %v583, 16
        %v650 = vrot.slane %v648, 1
        %v651 = vor.u32 %v646, %v650
        %v653 = vshll.u32 %v593, 16
        %v655 = vrot.slane %v653, 1
        %v656 = vsel %vm608, %v651, %v655
        %v658 = vshrl.u32 %v584, 16
        %v660 = vshll.u32 %v584, 16
        %v662 = vrot.slane %v660, 1
        %v663 = vor.u32 %v658, %v662
        %v665 = vshll.u32 %v594, 16
        %v667 = vrot.slane %v665, 1
        %v668 = vsel %vm608, %v663, %v667
        %v670 = vshrl.u32 %v585, 16
        %v672 = vshll.u32 %v585, 16
        %v674 = vrot.slane %v672, 1
        %v675 = vor.u32 %v670, %v674
        %v677 = vshll.u32 %v595, 16
        %v679 = vrot.slane %v677, 1
        %v680 = vsel %vm608, %v675, %v679
        %v682 = vshrl.u32 %v586, 16
        %v684 = vshll.u32 %v586, 16
        %v686 = vrot.slane %v684, 1
        %v687 = vor.u32 %v682, %v686
        %v689 = vshll.u32 %v596, 16
        %v691 = vrot.slane %v689, 1
        %v692 = vsel %vm608, %v687, %v691
        %v694 = vshrl.u32 %v587, 16
        %v696 = vshll.u32 %v587, 16
        %v698 = vrot.slane %v696, 1
        %v699 = vor.u32 %v694, %v698
        %v701 = vshll.u32 %v597, 16
        %v703 = vrot.slane %v701, 1
        %v704 = vsel %vm608, %v699, %v703
        %s705 = scalar_lea.vmem [#allocation8], 32
        %v706 = vld [vmem:[%s705] sm:$0xf]
        %v707 = vld [vmem:[%s705 + $0x4] sm:$0xf]
        %v708 = vld [vmem:[%s705 + $0x8] sm:$0xf]
        %v709 = vld [vmem:[%s705 + $0xc] sm:$0xf]
        %v710 = vld [vmem:[%s705 + $0x10] sm:$0xf]
        %v711 = vld [vmem:[%s705 + $0x14] sm:$0xf]
        %v712 = vld [vmem:[%s705 + $0x18] sm:$0xf]
        %v713 = vld [vmem:[%s705 + $0x1c] sm:$0xf]
        %v722 = vunpack.c.l.b16 %v706
        %v723 = vunpack.c.l.b16 %v707
        %v724 = vunpack.c.l.b16 %v708
        %v725 = vunpack.c.l.b16 %v709
        %v726 = vunpack.c.l.b16 %v710
        %v727 = vunpack.c.l.b16 %v711
        %v728 = vunpack.c.l.b16 %v712
        %v729 = vunpack.c.l.b16 %v713
        %v730 = vpack.c.b16 %v723, %v722
        %v731 = vpack.c.b16 %v725, %v724
        %v732 = vpack.c.b16 %v727, %v726
        %v733 = vpack.c.b16 %v729, %v728
        %vm738 = vcmask 523264
        %v740 = vsel %vm738, %v620, 0
        %v743 = vsel %vm738, %v632, 0
        %v746 = vsel %vm738, %v644, 0
        %v749 = vsel %vm738, %v656, 0
        %v752 = vsel %vm738, %v668, 0
        %v755 = vsel %vm738, %v680, 0
        %v758 = vsel %vm738, %v692, 0
        %v761 = vsel %vm738, %v704, 0
        %763 = vmatpush.bf16.msra.mxu0 0
        %764 = vmatpush.bf16.msra.mxu0 0
        %765 = vmatpush.bf16.msra.mxu0 0
        %766 = vmatpush.bf16.msra.mxu0 0
        %767 = vmatpush.bf16.msra.mxu0 %v733
        %768 = vmatpush.bf16.msra.mxu0 %v732
        %769 = vmatpush.bf16.msra.mxu0 %v731
        %770 = vmatpush.bf16.msra.mxu0 %v730
        %771 = vmatmul.bf16.gmra.mxu0 %v740
        %v772 = vpop.f32.mrf.mxu0
        %v773 = vadd.f32 0.0, %v772
        %v774 = vpop.f32.mrf.mxu0
        %v775 = vadd.f32 0.0, %v774
        %776 = vmatmul.bf16.gmra.mxu0 %v743
        %v777 = vpop.f32.mrf.mxu0
        %v778 = vadd.f32 0.0, %v777
        %v779 = vpop.f32.mrf.mxu0
        %v780 = vadd.f32 0.0, %v779
        %781 = vmatmul.bf16.gmra.mxu0 %v746
        %v782 = vpop.f32.mrf.mxu0
        %v783 = vadd.f32 0.0, %v782
        %v784 = vpop.f32.mrf.mxu0
        %v785 = vadd.f32 0.0, %v784
        %786 = vmatmul.bf16.gmra.mxu0 %v749
        %v787 = vpop.f32.mrf.mxu0
        %v788 = vadd.f32 0.0, %v787
        %v789 = vpop.f32.mrf.mxu0
        %v790 = vadd.f32 0.0, %v789
        %791 = vmatmul.bf16.gmra.mxu0 %v752
        %v792 = vpop.f32.mrf.mxu0
        %v793 = vadd.f32 0.0, %v792
        %v794 = vpop.f32.mrf.mxu0
        %v795 = vadd.f32 0.0, %v794
        %796 = vmatmul.bf16.gmra.mxu0 %v755
        %v797 = vpop.f32.mrf.mxu0
        %v798 = vadd.f32 0.0, %v797
        %v799 = vpop.f32.mrf.mxu0
        %v800 = vadd.f32 0.0, %v799
        %801 = vmatmul.bf16.gmra.mxu0 %v758
        %v802 = vpop.f32.mrf.mxu0
        %v803 = vadd.f32 0.0, %v802
        %v804 = vpop.f32.mrf.mxu0
        %v805 = vadd.f32 0.0, %v804
        %806 = vmatmul.bf16.gmra.mxu0 %v761
        %v807 = vpop.f32.mrf.mxu0
        %v808 = vadd.f32 0.0, %v807
        %v809 = vpop.f32.mrf.mxu0
        %v810 = vadd.f32 0.0, %v809
        %811 = vdwg.mxu0
        %v820 = vunpack.c.l.b16 %v600
        %v821 = vunpack.c.l.b16 %v601
        %v822 = vunpack.c.l.b16 %v602
        %v823 = vunpack.c.l.b16 %v603
        %v824 = vunpack.c.l.b16 %v604
        %v825 = vunpack.c.l.b16 %v605
        %v826 = vunpack.c.l.b16 %v606
        %v827 = vunpack.c.l.b16 %v607
        %v828 = vpack.c.b16 %v821, %v820
        %v829 = vpack.c.b16 %v823, %v822
        %v830 = vpack.c.b16 %v825, %v824
        %v831 = vpack.c.b16 %v827, %v826
        %v836 = vsel %vm738, %v580, 0
        %v838 = vsel %vm738, %v581, 0
        %v840 = vsel %vm738, %v582, 0
        %v842 = vsel %vm738, %v583, 0
        %v844 = vsel %vm738, %v584, 0
        %v846 = vsel %vm738, %v585, 0
        %v848 = vsel %vm738, %v586, 0
        %v850 = vsel %vm738, %v587, 0
        %852 = vmatpush.bf16.msra.mxu0 0
        %853 = vmatpush.bf16.msra.mxu0 0
        %854 = vmatpush.bf16.msra.mxu0 0
        %855 = vmatpush.bf16.msra.mxu0 0
        %856 = vmatpush.bf16.msra.mxu0 %v831
        %857 = vmatpush.bf16.msra.mxu0 %v830
        %858 = vmatpush.bf16.msra.mxu0 %v829
        %859 = vmatpush.bf16.msra.mxu0 %v828
        %860 = vmatmul.bf16.gmra.mxu0 %v836
        %v861 = vpop.f32.mrf.mxu0
        %v862 = vadd.f32 %v773, %v861
        %v863 = vpop.f32.mrf.mxu0
        %v864 = vadd.f32 %v775, %v863
        %865 = vmatmul.bf16.gmra.mxu0 %v838
        %v866 = vpop.f32.mrf.mxu0
        %v867 = vadd.f32 %v778, %v866
        %v868 = vpop.f32.mrf.mxu0
        %v869 = vadd.f32 %v780, %v868
        %870 = vmatmul.bf16.gmra.mxu0 %v840
        %v871 = vpop.f32.mrf.mxu0
        %v872 = vadd.f32 %v783, %v871
        %v873 = vpop.f32.mrf.mxu0
        %v874 = vadd.f32 %v785, %v873
        %875 = vmatmul.bf16.gmra.mxu0 %v842
        %v876 = vpop.f32.mrf.mxu0
        %v877 = vadd.f32 %v788, %v876
        %v878 = vpop.f32.mrf.mxu0
        %v879 = vadd.f32 %v790, %v878
        %880 = vmatmul.bf16.gmra.mxu0 %v844
        %v881 = vpop.f32.mrf.mxu0
        %v882 = vadd.f32 %v793, %v881
        %v883 = vpop.f32.mrf.mxu0
        %v884 = vadd.f32 %v795, %v883
        %885 = vmatmul.bf16.gmra.mxu0 %v846
        %v886 = vpop.f32.mrf.mxu0
        %v887 = vadd.f32 %v798, %v886
        %v888 = vpop.f32.mrf.mxu0
        %v889 = vadd.f32 %v800, %v888
        %890 = vmatmul.bf16.gmra.mxu0 %v848
        %v891 = vpop.f32.mrf.mxu0
        %v892 = vadd.f32 %v803, %v891
        %v893 = vpop.f32.mrf.mxu0
        %v894 = vadd.f32 %v805, %v893
        %895 = vmatmul.bf16.gmra.mxu0 %v850
        %v896 = vpop.f32.mrf.mxu0
        %v897 = vadd.f32 %v808, %v896
        %v898 = vpop.f32.mrf.mxu0
        %v899 = vadd.f32 %v810, %v898
        %900 = vdwg.mxu0
        %vm917 = vcmask 1046528
        %v918 = vrot.slane %v580, 1
        %v919 = vrot.slane %v590, 1
        %v920 = vsel %vm917, %v918, %v919
        %v921 = vrot.slane %v581, 1
        %v922 = vrot.slane %v591, 1
        %v923 = vsel %vm917, %v921, %v922
        %v924 = vrot.slane %v582, 1
        %v925 = vrot.slane %v592, 1
        %v926 = vsel %vm917, %v924, %v925
        %v927 = vrot.slane %v583, 1
        %v928 = vrot.slane %v593, 1
        %v929 = vsel %vm917, %v927, %v928
        %v930 = vrot.slane %v584, 1
        %v931 = vrot.slane %v594, 1
        %v932 = vsel %vm917, %v930, %v931
        %v933 = vrot.slane %v585, 1
        %v934 = vrot.slane %v595, 1
        %v935 = vsel %vm917, %v933, %v934
        %v936 = vrot.slane %v586, 1
        %v937 = vrot.slane %v596, 1
        %v938 = vsel %vm917, %v936, %v937
        %v939 = vrot.slane %v587, 1
        %v940 = vrot.slane %v597, 1
        %v941 = vsel %vm917, %v939, %v940
        %s942 = scalar_lea.vmem [#allocation8], 64
        %v943 = vld [vmem:[%s942] sm:$0xf]
        %v944 = vld [vmem:[%s942 + $0x4] sm:$0xf]
        %v945 = vld [vmem:[%s942 + $0x8] sm:$0xf]
        %v946 = vld [vmem:[%s942 + $0xc] sm:$0xf]
        %v947 = vld [vmem:[%s942 + $0x10] sm:$0xf]
        %v948 = vld [vmem:[%s942 + $0x14] sm:$0xf]
        %v949 = vld [vmem:[%s942 + $0x18] sm:$0xf]
        %v950 = vld [vmem:[%s942 + $0x1c] sm:$0xf]
        %v959 = vunpack.c.l.b16 %v943
        %v960 = vunpack.c.l.b16 %v944
        %v961 = vunpack.c.l.b16 %v945
        %v962 = vunpack.c.l.b16 %v946
        %v963 = vunpack.c.l.b16 %v947
        %v964 = vunpack.c.l.b16 %v948
        %v965 = vunpack.c.l.b16 %v949
        %v966 = vunpack.c.l.b16 %v950
        %v967 = vpack.c.b16 %v960, %v959
        %v968 = vpack.c.b16 %v962, %v961
        %v969 = vpack.c.b16 %v964, %v963
        %v970 = vpack.c.b16 %v966, %v965
        %v976 = vsel %vm738, %v920, 0
        %v979 = vsel %vm738, %v923, 0
        %v982 = vsel %vm738, %v926, 0
        %v985 = vsel %vm738, %v929, 0
        %v988 = vsel %vm738, %v932, 0
        %v991 = vsel %vm738, %v935, 0
        %v994 = vsel %vm738, %v938, 0
        %v997 = vsel %vm738, %v941, 0
        %999 = vmatpush.bf16.msra.mxu0 0
        %1000 = vmatpush.bf16.msra.mxu0 0
        %1001 = vmatpush.bf16.msra.mxu0 0
        %1002 = vmatpush.bf16.msra.mxu0 0
        %1003 = vmatpush.bf16.msra.mxu0 %v970
        %1004 = vmatpush.bf16.msra.mxu0 %v969
        %1005 = vmatpush.bf16.msra.mxu0 %v968
        %1006 = vmatpush.bf16.msra.mxu0 %v967
        %1007 = vmatmul.bf16.gmra.mxu0 %v976
        %v1008 = vpop.f32.mrf.mxu0
        %v1009 = vadd.f32 0.0, %v1008
        %v1010 = vpop.f32.mrf.mxu0
        %v1011 = vadd.f32 0.0, %v1010
        %1012 = vmatmul.bf16.gmra.mxu0 %v979
        %v1013 = vpop.f32.mrf.mxu0
        %v1014 = vadd.f32 0.0, %v1013
        %v1015 = vpop.f32.mrf.mxu0
        %v1016 = vadd.f32 0.0, %v1015
        %1017 = vmatmul.bf16.gmra.mxu0 %v982
        %v1018 = vpop.f32.mrf.mxu0
        %v1019 = vadd.f32 0.0, %v1018
        %v1020 = vpop.f32.mrf.mxu0
        %v1021 = vadd.f32 0.0, %v1020
        %1022 = vmatmul.bf16.gmra.mxu0 %v985
        %v1023 = vpop.f32.mrf.mxu0
        %v1024 = vadd.f32 0.0, %v1023
        %v1025 = vpop.f32.mrf.mxu0
        %v1026 = vadd.f32 0.0, %v1025
        %1027 = vmatmul.bf16.gmra.mxu0 %v988
        %v1028 = vpop.f32.mrf.mxu0
        %v1029 = vadd.f32 0.0, %v1028
        %v1030 = vpop.f32.mrf.mxu0
        %v1031 = vadd.f32 0.0, %v1030
        %1032 = vmatmul.bf16.gmra.mxu0 %v991
        %v1033 = vpop.f32.mrf.mxu0
        %v1034 = vadd.f32 0.0, %v1033
        %v1035 = vpop.f32.mrf.mxu0
        %v1036 = vadd.f32 0.0, %v1035
        %1037 = vmatmul.bf16.gmra.mxu0 %v994
        %v1038 = vpop.f32.mrf.mxu0
        %v1039 = vadd.f32 0.0, %v1038
        %v1040 = vpop.f32.mrf.mxu0
        %v1041 = vadd.f32 0.0, %v1040
        %1042 = vmatmul.bf16.gmra.mxu0 %v997
        %v1043 = vpop.f32.mrf.mxu0
        %v1044 = vadd.f32 0.0, %v1043
        %v1045 = vpop.f32.mrf.mxu0
        %v1046 = vadd.f32 0.0, %v1045
        %1047 = vdwg.mxu0
        %v1048 = vadd.f32 %v862, %v1009
        %v1049 = vadd.f32 %v864, %v1011
        %v1050 = vadd.f32 %v867, %v1014
        %v1051 = vadd.f32 %v869, %v1016
        %v1052 = vadd.f32 %v872, %v1019
        %v1053 = vadd.f32 %v874, %v1021
        %v1054 = vadd.f32 %v877, %v1024
        %v1055 = vadd.f32 %v879, %v1026
        %v1056 = vadd.f32 %v882, %v1029
        %v1057 = vadd.f32 %v884, %v1031
        %v1058 = vadd.f32 %v887, %v1034
        %v1059 = vadd.f32 %v889, %v1036
        %v1060 = vadd.f32 %v892, %v1039
        %v1061 = vadd.f32 %v894, %v1041
        %v1062 = vadd.f32 %v897, %v1044
        %v1063 = vadd.f32 %v899, %v1046
        %s1064 = scalar_lea.vmem [#allocation8], 96
        %v1065 = vld [vmem:[%s1064] sm:$0xf]
        %v1066 = vld [vmem:[%s1064 + $0x4] sm:$0xf]
        %v1067 = vld [vmem:[%s1064 + $0x8] sm:$0xf]
        %v1068 = vld [vmem:[%s1064 + $0xc] sm:$0xf]
        %v1069 = vld [vmem:[%s1064 + $0x10] sm:$0xf]
        %v1070 = vld [vmem:[%s1064 + $0x14] sm:$0xf]
        %v1071 = vld [vmem:[%s1064 + $0x18] sm:$0xf]
        %v1072 = vld [vmem:[%s1064 + $0x1c] sm:$0xf]
        %v1081 = vunpack.c.l.b16 %v1065
        %v1082 = vunpack.c.l.b16 %v1066
        %v1083 = vunpack.c.l.b16 %v1067
        %v1084 = vunpack.c.l.b16 %v1068
        %v1085 = vunpack.c.l.b16 %v1069
        %v1086 = vunpack.c.l.b16 %v1070
        %v1087 = vunpack.c.l.b16 %v1071
        %v1088 = vunpack.c.l.b16 %v1072
        %v1089 = vpack.c.b16 %v1082, %v1081
        %v1090 = vpack.c.b16 %v1084, %v1083
        %v1091 = vpack.c.b16 %v1086, %v1085
        %v1092 = vpack.c.b16 %v1088, %v1087
        %v1098 = vsel %vm738, %v588, 0
        %1100 = vmatpush.bf16.msra.mxu0 0
        %1101 = vmatpush.bf16.msra.mxu0 0
        %1102 = vmatpush.bf16.msra.mxu0 0
        %1103 = vmatpush.bf16.msra.mxu0 0
        %1104 = vmatpush.bf16.msra.mxu0 %v1092
        %1105 = vmatpush.bf16.msra.mxu0 %v1091
        %1106 = vmatpush.bf16.msra.mxu0 %v1090
        %1107 = vmatpush.bf16.msra.mxu0 %v1089
        %1108 = vmatmul.bf16.gmra.mxu0 %v838
        %v1109 = vpop.f32.mrf.mxu0
        %v1110 = vadd.f32 0.0, %v1109
        %v1111 = vpop.f32.mrf.mxu0
        %v1112 = vadd.f32 0.0, %v1111
        %1113 = vmatmul.bf16.gmra.mxu0 %v840
        %v1114 = vpop.f32.mrf.mxu0
        %v1115 = vadd.f32 0.0, %v1114
        %v1116 = vpop.f32.mrf.mxu0
        %v1117 = vadd.f32 0.0, %v1116
        %1118 = vmatmul.bf16.gmra.mxu0 %v842
        %v1119 = vpop.f32.mrf.mxu0
        %v1120 = vadd.f32 0.0, %v1119
        %v1121 = vpop.f32.mrf.mxu0
        %v1122 = vadd.f32 0.0, %v1121
        %1123 = vmatmul.bf16.gmra.mxu0 %v844
        %v1124 = vpop.f32.mrf.mxu0
        %v1125 = vadd.f32 0.0, %v1124
        %v1126 = vpop.f32.mrf.mxu0
        %v1127 = vadd.f32 0.0, %v1126
        %1128 = vmatmul.bf16.gmra.mxu0 %v846
        %v1129 = vpop.f32.mrf.mxu0
        %v1130 = vadd.f32 0.0, %v1129
        %v1131 = vpop.f32.mrf.mxu0
        %v1132 = vadd.f32 0.0, %v1131
        %1133 = vmatmul.bf16.gmra.mxu0 %v848
        %v1134 = vpop.f32.mrf.mxu0
        %v1135 = vadd.f32 0.0, %v1134
        %v1136 = vpop.f32.mrf.mxu0
        %v1137 = vadd.f32 0.0, %v1136
        %1138 = vmatmul.bf16.gmra.mxu0 %v850
        %v1139 = vpop.f32.mrf.mxu0
        %v1140 = vadd.f32 0.0, %v1139
        %v1141 = vpop.f32.mrf.mxu0
        %v1142 = vadd.f32 0.0, %v1141
        %1143 = vmatmul.bf16.gmra.mxu0 %v1098
        %v1144 = vpop.f32.mrf.mxu0
        %v1145 = vadd.f32 0.0, %v1144
        %v1146 = vpop.f32.mrf.mxu0
        %v1147 = vadd.f32 0.0, %v1146
        %1148 = vdwg.mxu0
        %v1149 = vadd.f32 %v1048, %v1110
        %v1150 = vadd.f32 %v1049, %v1112
        %v1151 = vadd.f32 %v1050, %v1115
        %v1152 = vadd.f32 %v1051, %v1117
        %v1153 = vadd.f32 %v1052, %v1120
        %v1154 = vadd.f32 %v1053, %v1122
        %v1155 = vadd.f32 %v1054, %v1125
        %v1156 = vadd.f32 %v1055, %v1127
        %v1157 = vadd.f32 %v1056, %v1130
        %v1158 = vadd.f32 %v1057, %v1132
        %v1159 = vadd.f32 %v1058, %v1135
        %v1160 = vadd.f32 %v1059, %v1137
        %v1161 = vadd.f32 %v1060, %v1140
        %v1162 = vadd.f32 %v1061, %v1142
        %v1163 = vadd.f32 %v1062, %v1145
        %v1164 = vadd.f32 %v1063, %v1147
        %v1165 = vshrl.u32 %v588, 16
        %v1167 = vshll.u32 %v588, 16
        %v1169 = vrot.slane %v1167, 1
        %v1170 = vor.u32 %v1165, %v1169
        %v1172 = vshll.u32 %v598, 16
        %v1174 = vrot.slane %v1172, 1
        %v1175 = vsel %vm608, %v1170, %v1174
        %s1176 = scalar_lea.vmem [#allocation8], 128
        %v1177 = vld [vmem:[%s1176] sm:$0xf]
        %v1178 = vld [vmem:[%s1176 + $0x4] sm:$0xf]
        %v1179 = vld [vmem:[%s1176 + $0x8] sm:$0xf]
        %v1180 = vld [vmem:[%s1176 + $0xc] sm:$0xf]
        %v1181 = vld [vmem:[%s1176 + $0x10] sm:$0xf]
        %v1182 = vld [vmem:[%s1176 + $0x14] sm:$0xf]
        %v1183 = vld [vmem:[%s1176 + $0x18] sm:$0xf]
        %v1184 = vld [vmem:[%s1176 + $0x1c] sm:$0xf]
        %v1193 = vunpack.c.l.b16 %v1177
        %v1194 = vunpack.c.l.b16 %v1178
        %v1195 = vunpack.c.l.b16 %v1179
        %v1196 = vunpack.c.l.b16 %v1180
        %v1197 = vunpack.c.l.b16 %v1181
        %v1198 = vunpack.c.l.b16 %v1182
        %v1199 = vunpack.c.l.b16 %v1183
        %v1200 = vunpack.c.l.b16 %v1184
        %v1201 = vpack.c.b16 %v1194, %v1193
        %v1202 = vpack.c.b16 %v1196, %v1195
        %v1203 = vpack.c.b16 %v1198, %v1197
        %v1204 = vpack.c.b16 %v1200, %v1199
        %v1210 = vsel %vm738, %v1175, 0
        %1212 = vmatpush.bf16.msra.mxu0 0
        %1213 = vmatpush.bf16.msra.mxu0 0
        %1214 = vmatpush.bf16.msra.mxu0 0
        %1215 = vmatpush.bf16.msra.mxu0 0
        %1216 = vmatpush.bf16.msra.mxu0 %v1204
        %1217 = vmatpush.bf16.msra.mxu0 %v1203
        %1218 = vmatpush.bf16.msra.mxu0 %v1202
        %1219 = vmatpush.bf16.msra.mxu0 %v1201
        %1220 = vmatmul.bf16.gmra.mxu0 %v743
        %v1221 = vpop.f32.mrf.mxu0
        %v1222 = vadd.f32 0.0, %v1221
        %v1223 = vpop.f32.mrf.mxu0
        %v1224 = vadd.f32 0.0, %v1223
        %1225 = vmatmul.bf16.gmra.mxu0 %v746
        %v1226 = vpop.f32.mrf.mxu0
        %v1227 = vadd.f32 0.0, %v1226
        %v1228 = vpop.f32.mrf.mxu0
        %v1229 = vadd.f32 0.0, %v1228
        %1230 = vmatmul.bf16.gmra.mxu0 %v749
        %v1231 = vpop.f32.mrf.mxu0
        %v1232 = vadd.f32 0.0, %v1231
        %v1233 = vpop.f32.mrf.mxu0
        %v1234 = vadd.f32 0.0, %v1233
        %1235 = vmatmul.bf16.gmra.mxu0 %v752
        %v1236 = vpop.f32.mrf.mxu0
        %v1237 = vadd.f32 0.0, %v1236
        %v1238 = vpop.f32.mrf.mxu0
        %v1239 = vadd.f32 0.0, %v1238
        %1240 = vmatmul.bf16.gmra.mxu0 %v755
        %v1241 = vpop.f32.mrf.mxu0
        %v1242 = vadd.f32 0.0, %v1241
        %v1243 = vpop.f32.mrf.mxu0
        %v1244 = vadd.f32 0.0, %v1243
        %1245 = vmatmul.bf16.gmra.mxu0 %v758
        %v1246 = vpop.f32.mrf.mxu0
        %v1247 = vadd.f32 0.0, %v1246
        %v1248 = vpop.f32.mrf.mxu0
        %v1249 = vadd.f32 0.0, %v1248
        %1250 = vmatmul.bf16.gmra.mxu0 %v761
        %v1251 = vpop.f32.mrf.mxu0
        %v1252 = vadd.f32 0.0, %v1251
        %v1253 = vpop.f32.mrf.mxu0
        %v1254 = vadd.f32 0.0, %v1253
        %1255 = vmatmul.bf16.gmra.mxu0 %v1210
        %v1256 = vpop.f32.mrf.mxu0
        %v1257 = vadd.f32 0.0, %v1256
        %v1258 = vpop.f32.mrf.mxu0
        %v1259 = vadd.f32 0.0, %v1258
        %1260 = vdwg.mxu0
        %v1261 = vadd.f32 %v1149, %v1222
        %v1262 = vadd.f32 %v1150, %v1224
        %v1263 = vadd.f32 %v1151, %v1227
        %v1264 = vadd.f32 %v1152, %v1229
        %v1265 = vadd.f32 %v1153, %v1232
        %v1266 = vadd.f32 %v1154, %v1234
        %v1267 = vadd.f32 %v1155, %v1237
        %v1268 = vadd.f32 %v1156, %v1239
        %v1269 = vadd.f32 %v1157, %v1242
        %v1270 = vadd.f32 %v1158, %v1244
        %v1271 = vadd.f32 %v1159, %v1247
        %v1272 = vadd.f32 %v1160, %v1249
        %v1273 = vadd.f32 %v1161, %v1252
        %v1274 = vadd.f32 %v1162, %v1254
        %v1275 = vadd.f32 %v1163, %v1257
        %v1276 = vadd.f32 %v1164, %v1259
        %v1279 = vrot.slane %v588, 1
        %v1280 = vrot.slane %v598, 1
        %v1281 = vsel %vm917, %v1279, %v1280
        %s1282 = scalar_lea.vmem [#allocation8], 160
        %v1283 = vld [vmem:[%s1282] sm:$0xf]
        %v1284 = vld [vmem:[%s1282 + $0x4] sm:$0xf]
        %v1285 = vld [vmem:[%s1282 + $0x8] sm:$0xf]
        %v1286 = vld [vmem:[%s1282 + $0xc] sm:$0xf]
        %v1287 = vld [vmem:[%s1282 + $0x10] sm:$0xf]
        %v1288 = vld [vmem:[%s1282 + $0x14] sm:$0xf]
        %v1289 = vld [vmem:[%s1282 + $0x18] sm:$0xf]
        %v1290 = vld [vmem:[%s1282 + $0x1c] sm:$0xf]
        %v1299 = vunpack.c.l.b16 %v1283
        %v1300 = vunpack.c.l.b16 %v1284
        %v1301 = vunpack.c.l.b16 %v1285
        %v1302 = vunpack.c.l.b16 %v1286
        %v1303 = vunpack.c.l.b16 %v1287
        %v1304 = vunpack.c.l.b16 %v1288
        %v1305 = vunpack.c.l.b16 %v1289
        %v1306 = vunpack.c.l.b16 %v1290
        %v1307 = vpack.c.b16 %v1300, %v1299
        %v1308 = vpack.c.b16 %v1302, %v1301
        %v1309 = vpack.c.b16 %v1304, %v1303
        %v1310 = vpack.c.b16 %v1306, %v1305
        %v1316 = vsel %vm738, %v1281, 0
        %1318 = vmatpush.bf16.msra.mxu0 0
        %1319 = vmatpush.bf16.msra.mxu0 0
        %1320 = vmatpush.bf16.msra.mxu0 0
        %1321 = vmatpush.bf16.msra.mxu0 0
        %1322 = vmatpush.bf16.msra.mxu0 %v1310
        %1323 = vmatpush.bf16.msra.mxu0 %v1309
        %1324 = vmatpush.bf16.msra.mxu0 %v1308
        %1325 = vmatpush.bf16.msra.mxu0 %v1307
        %1326 = vmatmul.bf16.gmra.mxu0 %v979
        %v1327 = vpop.f32.mrf.mxu0
        %v1328 = vadd.f32 0.0, %v1327
        %v1329 = vpop.f32.mrf.mxu0
        %v1330 = vadd.f32 0.0, %v1329
        %1331 = vmatmul.bf16.gmra.mxu0 %v982
        %v1332 = vpop.f32.mrf.mxu0
        %v1333 = vadd.f32 0.0, %v1332
        %v1334 = vpop.f32.mrf.mxu0
        %v1335 = vadd.f32 0.0, %v1334
        %1336 = vmatmul.bf16.gmra.mxu0 %v985
        %v1337 = vpop.f32.mrf.mxu0
        %v1338 = vadd.f32 0.0, %v1337
        %v1339 = vpop.f32.mrf.mxu0
        %v1340 = vadd.f32 0.0, %v1339
        %1341 = vmatmul.bf16.gmra.mxu0 %v988
        %v1342 = vpop.f32.mrf.mxu0
        %v1343 = vadd.f32 0.0, %v1342
        %v1344 = vpop.f32.mrf.mxu0
        %v1345 = vadd.f32 0.0, %v1344
        %1346 = vmatmul.bf16.gmra.mxu0 %v991
        %v1347 = vpop.f32.mrf.mxu0
        %v1348 = vadd.f32 0.0, %v1347
        %v1349 = vpop.f32.mrf.mxu0
        %v1350 = vadd.f32 0.0, %v1349
        %1351 = vmatmul.bf16.gmra.mxu0 %v994
        %v1352 = vpop.f32.mrf.mxu0
        %v1353 = vadd.f32 0.0, %v1352
        %v1354 = vpop.f32.mrf.mxu0
        %v1355 = vadd.f32 0.0, %v1354
        %1356 = vmatmul.bf16.gmra.mxu0 %v997
        %v1357 = vpop.f32.mrf.mxu0
        %v1358 = vadd.f32 0.0, %v1357
        %v1359 = vpop.f32.mrf.mxu0
        %v1360 = vadd.f32 0.0, %v1359
        %1361 = vmatmul.bf16.gmra.mxu0 %v1316
        %v1362 = vpop.f32.mrf.mxu0
        %v1363 = vadd.f32 0.0, %v1362
        %v1364 = vpop.f32.mrf.mxu0
        %v1365 = vadd.f32 0.0, %v1364
        %1366 = vdwg.mxu0
        %v1367 = vadd.f32 %v1261, %v1328
        %v1368 = vadd.f32 %v1262, %v1330
        %v1369 = vadd.f32 %v1263, %v1333
        %v1370 = vadd.f32 %v1264, %v1335
        %v1371 = vadd.f32 %v1265, %v1338
        %v1372 = vadd.f32 %v1266, %v1340
        %v1373 = vadd.f32 %v1267, %v1343
        %v1374 = vadd.f32 %v1268, %v1345
        %v1375 = vadd.f32 %v1269, %v1348
        %v1376 = vadd.f32 %v1270, %v1350
        %v1377 = vadd.f32 %v1271, %v1353
        %v1378 = vadd.f32 %v1272, %v1355
        %v1379 = vadd.f32 %v1273, %v1358
        %v1380 = vadd.f32 %v1274, %v1360
        %v1381 = vadd.f32 %v1275, %v1363
        %v1382 = vadd.f32 %v1276, %v1365
        %s1383 = scalar_lea.vmem [#allocation8], 192
        %v1384 = vld [vmem:[%s1383] sm:$0xf]
        %v1385 = vld [vmem:[%s1383 + $0x4] sm:$0xf]
        %v1386 = vld [vmem:[%s1383 + $0x8] sm:$0xf]
        %v1387 = vld [vmem:[%s1383 + $0xc] sm:$0xf]
        %v1388 = vld [vmem:[%s1383 + $0x10] sm:$0xf]
        %v1389 = vld [vmem:[%s1383 + $0x14] sm:$0xf]
        %v1390 = vld [vmem:[%s1383 + $0x18] sm:$0xf]
        %v1391 = vld [vmem:[%s1383 + $0x1c] sm:$0xf]
        %v1400 = vunpack.c.l.b16 %v1384
        %v1401 = vunpack.c.l.b16 %v1385
        %v1402 = vunpack.c.l.b16 %v1386
        %v1403 = vunpack.c.l.b16 %v1387
        %v1404 = vunpack.c.l.b16 %v1388
        %v1405 = vunpack.c.l.b16 %v1389
        %v1406 = vunpack.c.l.b16 %v1390
        %v1407 = vunpack.c.l.b16 %v1391
        %v1408 = vpack.c.b16 %v1401, %v1400
        %v1409 = vpack.c.b16 %v1403, %v1402
        %v1410 = vpack.c.b16 %v1405, %v1404
        %v1411 = vpack.c.b16 %v1407, %v1406
        %v1417 = vsel %vm738, %v589, 0
        %1419 = vmatpush.bf16.msra.mxu0 0
        %1420 = vmatpush.bf16.msra.mxu0 0
        %1421 = vmatpush.bf16.msra.mxu0 0
        %1422 = vmatpush.bf16.msra.mxu0 0
        %1423 = vmatpush.bf16.msra.mxu0 %v1411
        %1424 = vmatpush.bf16.msra.mxu0 %v1410
        %1425 = vmatpush.bf16.msra.mxu0 %v1409
        %1426 = vmatpush.bf16.msra.mxu0 %v1408
        %1427 = vmatmul.bf16.gmra.mxu0 %v840
        %v1428 = vpop.f32.mrf.mxu0
        %v1429 = vadd.f32 0.0, %v1428
        %v1430 = vpop.f32.mrf.mxu0
        %v1431 = vadd.f32 0.0, %v1430
        %1432 = vmatmul.bf16.gmra.mxu0 %v842
        %v1433 = vpop.f32.mrf.mxu0
        %v1434 = vadd.f32 0.0, %v1433
        %v1435 = vpop.f32.mrf.mxu0
        %v1436 = vadd.f32 0.0, %v1435
        %1437 = vmatmul.bf16.gmra.mxu0 %v844
        %v1438 = vpop.f32.mrf.mxu0
        %v1439 = vadd.f32 0.0, %v1438
        %v1440 = vpop.f32.mrf.mxu0
        %v1441 = vadd.f32 0.0, %v1440
        %1442 = vmatmul.bf16.gmra.mxu0 %v846
        %v1443 = vpop.f32.mrf.mxu0
        %v1444 = vadd.f32 0.0, %v1443
        %v1445 = vpop.f32.mrf.mxu0
        %v1446 = vadd.f32 0.0, %v1445
        %1447 = vmatmul.bf16.gmra.mxu0 %v848
        %v1448 = vpop.f32.mrf.mxu0
        %v1449 = vadd.f32 0.0, %v1448
        %v1450 = vpop.f32.mrf.mxu0
        %v1451 = vadd.f32 0.0, %v1450
        %1452 = vmatmul.bf16.gmra.mxu0 %v850
        %v1453 = vpop.f32.mrf.mxu0
        %v1454 = vadd.f32 0.0, %v1453
        %v1455 = vpop.f32.mrf.mxu0
        %v1456 = vadd.f32 0.0, %v1455
        %1457 = vmatmul.bf16.gmra.mxu0 %v1098
        %v1458 = vpop.f32.mrf.mxu0
        %v1459 = vadd.f32 0.0, %v1458
        %v1460 = vpop.f32.mrf.mxu0
        %v1461 = vadd.f32 0.0, %v1460
        %1462 = vmatmul.bf16.gmra.mxu0 %v1417
        %v1463 = vpop.f32.mrf.mxu0
        %v1464 = vadd.f32 0.0, %v1463
        %v1465 = vpop.f32.mrf.mxu0
        %v1466 = vadd.f32 0.0, %v1465
        %1467 = vdwg.mxu0
        %v1468 = vadd.f32 %v1367, %v1429
        %v1469 = vadd.f32 %v1368, %v1431
        %v1470 = vadd.f32 %v1369, %v1434
        %v1471 = vadd.f32 %v1370, %v1436
        %v1472 = vadd.f32 %v1371, %v1439
        %v1473 = vadd.f32 %v1372, %v1441
        %v1474 = vadd.f32 %v1373, %v1444
        %v1475 = vadd.f32 %v1374, %v1446
        %v1476 = vadd.f32 %v1375, %v1449
        %v1477 = vadd.f32 %v1376, %v1451
        %v1478 = vadd.f32 %v1377, %v1454
        %v1479 = vadd.f32 %v1378, %v1456
        %v1480 = vadd.f32 %v1379, %v1459
        %v1481 = vadd.f32 %v1380, %v1461
        %v1482 = vadd.f32 %v1381, %v1464
        %v1483 = vadd.f32 %v1382, %v1466
        %v1484 = vshrl.u32 %v589, 16
        %v1486 = vshll.u32 %v589, 16
        %v1488 = vrot.slane %v1486, 1
        %v1489 = vor.u32 %v1484, %v1488
        %v1491 = vshll.u32 %v599, 16
        %v1493 = vrot.slane %v1491, 1
        %v1494 = vsel %vm608, %v1489, %v1493
        %s1495 = scalar_lea.vmem [#allocation8], 224
        %v1496 = vld [vmem:[%s1495] sm:$0xf]
        %v1497 = vld [vmem:[%s1495 + $0x4] sm:$0xf]
        %v1498 = vld [vmem:[%s1495 + $0x8] sm:$0xf]
        %v1499 = vld [vmem:[%s1495 + $0xc] sm:$0xf]
        %v1500 = vld [vmem:[%s1495 + $0x10] sm:$0xf]
        %v1501 = vld [vmem:[%s1495 + $0x14] sm:$0xf]
        %v1502 = vld [vmem:[%s1495 + $0x18] sm:$0xf]
        %v1503 = vld [vmem:[%s1495 + $0x1c] sm:$0xf]
        %v1512 = vunpack.c.l.b16 %v1496
        %v1513 = vunpack.c.l.b16 %v1497
        %v1514 = vunpack.c.l.b16 %v1498
        %v1515 = vunpack.c.l.b16 %v1499
        %v1516 = vunpack.c.l.b16 %v1500
        %v1517 = vunpack.c.l.b16 %v1501
        %v1518 = vunpack.c.l.b16 %v1502
        %v1519 = vunpack.c.l.b16 %v1503
        %v1520 = vpack.c.b16 %v1513, %v1512
        %v1521 = vpack.c.b16 %v1515, %v1514
        %v1522 = vpack.c.b16 %v1517, %v1516
        %v1523 = vpack.c.b16 %v1519, %v1518
        %v1529 = vsel %vm738, %v1494, 0
        %1531 = vmatpush.bf16.msra.mxu0 0
        %1532 = vmatpush.bf16.msra.mxu0 0
        %1533 = vmatpush.bf16.msra.mxu0 0
        %1534 = vmatpush.bf16.msra.mxu0 0
        %1535 = vmatpush.bf16.msra.mxu0 %v1523
        %1536 = vmatpush.bf16.msra.mxu0 %v1522
        %1537 = vmatpush.bf16.msra.mxu0 %v1521
        %1538 = vmatpush.bf16.msra.mxu0 %v1520
        %1539 = vmatmul.bf16.gmra.mxu0 %v746
        %v1540 = vpop.f32.mrf.mxu0
        %v1541 = vadd.f32 0.0, %v1540
        %v1542 = vpop.f32.mrf.mxu0
        %v1543 = vadd.f32 0.0, %v1542
        %1544 = vmatmul.bf16.gmra.mxu0 %v749
        %v1545 = vpop.f32.mrf.mxu0
        %v1546 = vadd.f32 0.0, %v1545
        %v1547 = vpop.f32.mrf.mxu0
        %v1548 = vadd.f32 0.0, %v1547
        %1549 = vmatmul.bf16.gmra.mxu0 %v752
        %v1550 = vpop.f32.mrf.mxu0
        %v1551 = vadd.f32 0.0, %v1550
        %v1552 = vpop.f32.mrf.mxu0
        %v1553 = vadd.f32 0.0, %v1552
        %1554 = vmatmul.bf16.gmra.mxu0 %v755
        %v1555 = vpop.f32.mrf.mxu0
        %v1556 = vadd.f32 0.0, %v1555
        %v1557 = vpop.f32.mrf.mxu0
        %v1558 = vadd.f32 0.0, %v1557
        %1559 = vmatmul.bf16.gmra.mxu0 %v758
        %v1560 = vpop.f32.mrf.mxu0
        %v1561 = vadd.f32 0.0, %v1560
        %v1562 = vpop.f32.mrf.mxu0
        %v1563 = vadd.f32 0.0, %v1562
        %1564 = vmatmul.bf16.gmra.mxu0 %v761
        %v1565 = vpop.f32.mrf.mxu0
        %v1566 = vadd.f32 0.0, %v1565
        %v1567 = vpop.f32.mrf.mxu0
        %v1568 = vadd.f32 0.0, %v1567
        %1569 = vmatmul.bf16.gmra.mxu0 %v1210
        %v1570 = vpop.f32.mrf.mxu0
        %v1571 = vadd.f32 0.0, %v1570
        %v1572 = vpop.f32.mrf.mxu0
        %v1573 = vadd.f32 0.0, %v1572
        %1574 = vmatmul.bf16.gmra.mxu0 %v1529
        %v1575 = vpop.f32.mrf.mxu0
        %v1576 = vadd.f32 0.0, %v1575
        %v1577 = vpop.f32.mrf.mxu0
        %v1578 = vadd.f32 0.0, %v1577
        %1579 = vdwg.mxu0
        %v1580 = vadd.f32 %v1468, %v1541
        %v1581 = vadd.f32 %v1469, %v1543
        %v1582 = vadd.f32 %v1470, %v1546
        %v1583 = vadd.f32 %v1471, %v1548
        %v1584 = vadd.f32 %v1472, %v1551
        %v1585 = vadd.f32 %v1473, %v1553
        %v1586 = vadd.f32 %v1474, %v1556
        %v1587 = vadd.f32 %v1475, %v1558
        %v1588 = vadd.f32 %v1476, %v1561
        %v1589 = vadd.f32 %v1477, %v1563
        %v1590 = vadd.f32 %v1478, %v1566
        %v1591 = vadd.f32 %v1479, %v1568
        %v1592 = vadd.f32 %v1480, %v1571
        %v1593 = vadd.f32 %v1481, %v1573
        %v1594 = vadd.f32 %v1482, %v1576
        %v1595 = vadd.f32 %v1483, %v1578
        %v1598 = vrot.slane %v589, 1
        %v1599 = vrot.slane %v599, 1
        %v1600 = vsel %vm917, %v1598, %v1599
        %s1601 = scalar_lea.vmem [#allocation8], 256
        %v1602 = vld [vmem:[%s1601] sm:$0xf]
        %v1603 = vld [vmem:[%s1601 + $0x4] sm:$0xf]
        %v1604 = vld [vmem:[%s1601 + $0x8] sm:$0xf]
        %v1605 = vld [vmem:[%s1601 + $0xc] sm:$0xf]
        %v1606 = vld [vmem:[%s1601 + $0x10] sm:$0xf]
        %v1607 = vld [vmem:[%s1601 + $0x14] sm:$0xf]
        %v1608 = vld [vmem:[%s1601 + $0x18] sm:$0xf]
        %v1609 = vld [vmem:[%s1601 + $0x1c] sm:$0xf]
        %v1618 = vunpack.c.l.b16 %v1602
        %v1619 = vunpack.c.l.b16 %v1603
        %v1620 = vunpack.c.l.b16 %v1604
        %v1621 = vunpack.c.l.b16 %v1605
        %v1622 = vunpack.c.l.b16 %v1606
        %v1623 = vunpack.c.l.b16 %v1607
        %v1624 = vunpack.c.l.b16 %v1608
        %v1625 = vunpack.c.l.b16 %v1609
        %v1626 = vpack.c.b16 %v1619, %v1618
        %v1627 = vpack.c.b16 %v1621, %v1620
        %v1628 = vpack.c.b16 %v1623, %v1622
        %v1629 = vpack.c.b16 %v1625, %v1624
        %v1635 = vsel %vm738, %v1600, 0
        %1637 = vmatpush.bf16.msra.mxu0 0
        %1638 = vmatpush.bf16.msra.mxu0 0
        %1639 = vmatpush.bf16.msra.mxu0 0
        %1640 = vmatpush.bf16.msra.mxu0 0
        %1641 = vmatpush.bf16.msra.mxu0 %v1629
        %1642 = vmatpush.bf16.msra.mxu0 %v1628
        %1643 = vmatpush.bf16.msra.mxu0 %v1627
        %1644 = vmatpush.bf16.msra.mxu0 %v1626
        %1645 = vmatmul.bf16.gmra.mxu0 %v982
        %v1646 = vpop.f32.mrf.mxu0
        %v1647 = vadd.f32 0.0, %v1646
        %v1648 = vpop.f32.mrf.mxu0
        %v1649 = vadd.f32 0.0, %v1648
        %1650 = vmatmul.bf16.gmra.mxu0 %v985
        %v1651 = vpop.f32.mrf.mxu0
        %v1652 = vadd.f32 0.0, %v1651
        %v1653 = vpop.f32.mrf.mxu0
        %v1654 = vadd.f32 0.0, %v1653
        %1655 = vmatmul.bf16.gmra.mxu0 %v988
        %v1656 = vpop.f32.mrf.mxu0
        %v1657 = vadd.f32 0.0, %v1656
        %v1658 = vpop.f32.mrf.mxu0
        %v1659 = vadd.f32 0.0, %v1658
        %1660 = vmatmul.bf16.gmra.mxu0 %v991
        %v1661 = vpop.f32.mrf.mxu0
        %v1662 = vadd.f32 0.0, %v1661
        %v1663 = vpop.f32.mrf.mxu0
        %v1664 = vadd.f32 0.0, %v1663
        %1665 = vmatmul.bf16.gmra.mxu0 %v994
        %v1666 = vpop.f32.mrf.mxu0
        %v1667 = vadd.f32 0.0, %v1666
        %v1668 = vpop.f32.mrf.mxu0
        %v1669 = vadd.f32 0.0, %v1668
        %1670 = vmatmul.bf16.gmra.mxu0 %v997
        %v1671 = vpop.f32.mrf.mxu0
        %v1672 = vadd.f32 0.0, %v1671
        %v1673 = vpop.f32.mrf.mxu0
        %v1674 = vadd.f32 0.0, %v1673
        %1675 = vmatmul.bf16.gmra.mxu0 %v1316
        %v1676 = vpop.f32.mrf.mxu0
        %v1677 = vadd.f32 0.0, %v1676
        %v1678 = vpop.f32.mrf.mxu0
        %v1679 = vadd.f32 0.0, %v1678
        %1680 = vmatmul.bf16.gmra.mxu0 %v1635
        %v1681 = vpop.f32.mrf.mxu0
        %v1682 = vadd.f32 0.0, %v1681
        %v1683 = vpop.f32.mrf.mxu0
        %v1684 = vadd.f32 0.0, %v1683
        %1685 = vdwg.mxu0
        %v1686 = vadd.f32 %v1580, %v1647
        %v1687 = vadd.f32 %v1581, %v1649
        %v1688 = vadd.f32 %v1582, %v1652
        %v1689 = vadd.f32 %v1583, %v1654
        %v1690 = vadd.f32 %v1584, %v1657
        %v1691 = vadd.f32 %v1585, %v1659
        %v1692 = vadd.f32 %v1586, %v1662
        %v1693 = vadd.f32 %v1587, %v1664
        %v1694 = vadd.f32 %v1588, %v1667
        %v1695 = vadd.f32 %v1589, %v1669
        %v1696 = vadd.f32 %v1590, %v1672
        %v1697 = vadd.f32 %v1591, %v1674
        %v1698 = vadd.f32 %v1592, %v1677
        %v1699 = vadd.f32 %v1593, %v1679
        %v1700 = vadd.f32 %v1594, %v1682
        %v1701 = vadd.f32 %v1595, %v1684
        %v1702 = vld [vmem:[%s4] sm:$0x1]
        %v1704 = vperm.slane %v1702, 0
        %v1706 = vadd.f32 %v1686, %v1704
        %v1707 = vadd.f32 %v1687, %v1704
        %v1708 = vadd.f32 %v1688, %v1704
        %v1709 = vadd.f32 %v1689, %v1704
        %v1710 = vadd.f32 %v1690, %v1704
        %v1711 = vadd.f32 %v1691, %v1704
        %v1712 = vadd.f32 %v1692, %v1704
        %v1713 = vadd.f32 %v1693, %v1704
        %v1714 = vadd.f32 %v1694, %v1704
        %v1715 = vadd.f32 %v1695, %v1704
        %v1716 = vadd.f32 %v1696, %v1704
        %v1717 = vadd.f32 %v1697, %v1704
        %v1718 = vadd.f32 %v1698, %v1704
        %v1719 = vadd.f32 %v1699, %v1704
        %v1720 = vadd.f32 %v1700, %v1704
        %v1721 = vadd.f32 %v1701, %v1704
        %vm1722 = vcmp.gt.f32.partialorder %v1706, 0.0
        %vm1723 = vcmp.gt.f32.partialorder %v1707, 0.0
        %vm1724 = vcmp.gt.f32.partialorder %v1708, 0.0
        %vm1725 = vcmp.gt.f32.partialorder %v1709, 0.0
        %vm1726 = vcmp.gt.f32.partialorder %v1710, 0.0
        %vm1727 = vcmp.gt.f32.partialorder %v1711, 0.0
        %vm1728 = vcmp.gt.f32.partialorder %v1712, 0.0
        %vm1729 = vcmp.gt.f32.partialorder %v1713, 0.0
        %vm1730 = vcmp.gt.f32.partialorder %v1714, 0.0
        %vm1731 = vcmp.gt.f32.partialorder %v1715, 0.0
        %vm1732 = vcmp.gt.f32.partialorder %v1716, 0.0
        %vm1733 = vcmp.gt.f32.partialorder %v1717, 0.0
        %vm1734 = vcmp.gt.f32.partialorder %v1718, 0.0
        %vm1735 = vcmp.gt.f32.partialorder %v1719, 0.0
        %vm1736 = vcmp.gt.f32.partialorder %v1720, 0.0
        %vm1737 = vcmp.gt.f32.partialorder %v1721, 0.0
        %v1738 = vmul.f32 %v1706, 0.01
        %v1739 = vmul.f32 %v1707, 0.01
        %v1740 = vmul.f32 %v1708, 0.01
        %v1741 = vmul.f32 %v1709, 0.01
        %v1742 = vmul.f32 %v1710, 0.01
        %v1743 = vmul.f32 %v1711, 0.01
        %v1744 = vmul.f32 %v1712, 0.01
        %v1745 = vmul.f32 %v1713, 0.01
        %v1746 = vmul.f32 %v1714, 0.01
        %v1747 = vmul.f32 %v1715, 0.01
        %v1748 = vmul.f32 %v1716, 0.01
        %v1749 = vmul.f32 %v1717, 0.01
        %v1750 = vmul.f32 %v1718, 0.01
        %v1751 = vmul.f32 %v1719, 0.01
        %v1752 = vmul.f32 %v1720, 0.01
        %v1753 = vmul.f32 %v1721, 0.01
        %v1754 = vsel %vm1722, %v1706, %v1738
        %v1755 = vsel %vm1723, %v1707, %v1739
        %v1756 = vsel %vm1724, %v1708, %v1740
        %v1757 = vsel %vm1725, %v1709, %v1741
        %v1758 = vsel %vm1726, %v1710, %v1742
        %v1759 = vsel %vm1727, %v1711, %v1743
        %v1760 = vsel %vm1728, %v1712, %v1744
        %v1761 = vsel %vm1729, %v1713, %v1745
        %v1762 = vsel %vm1730, %v1714, %v1746
        %v1763 = vsel %vm1731, %v1715, %v1747
        %v1764 = vsel %vm1732, %v1716, %v1748
        %v1765 = vsel %vm1733, %v1717, %v1749
        %v1766 = vsel %vm1734, %v1718, %v1750
        %v1767 = vsel %vm1735, %v1719, %v1751
        %v1768 = vsel %vm1736, %v1720, %v1752
        %v1769 = vsel %vm1737, %v1721, %v1753
        %1770 = vst.msk [vmem:[%s393] sm:$0xff] %vm738, %v1754
        %1771 = vst.msk [vmem:[%s393 + $0x8] sm:$0xff] %vm738, %v1755
        %1772 = vst.msk [vmem:[%s393 + $0x10] sm:$0xff] %vm738, %v1756
        %1773 = vst.msk [vmem:[%s393 + $0x18] sm:$0xff] %vm738, %v1757
        %1774 = vst.msk [vmem:[%s393 + $0x20] sm:$0xff] %vm738, %v1758
        %1775 = vst.msk [vmem:[%s393 + $0x28] sm:$0xff] %vm738, %v1759
        %1776 = vst.msk [vmem:[%s393 + $0x30] sm:$0xff] %vm738, %v1760
        %1777 = vst.msk [vmem:[%s393 + $0x38] sm:$0xff] %vm738, %v1761
        %1778 = vst.msk [vmem:[%s393 + $0x40] sm:$0xff] %vm738, %v1762
        %1779 = vst.msk [vmem:[%s393 + $0x48] sm:$0xff] %vm738, %v1763
        %1780 = vst.msk [vmem:[%s393 + $0x50] sm:$0xff] %vm738, %v1764
        %1781 = vst.msk [vmem:[%s393 + $0x58] sm:$0xff] %vm738, %v1765
        %1782 = vst.msk [vmem:[%s393 + $0x60] sm:$0xff] %vm738, %v1766
        %1783 = vst.msk [vmem:[%s393 + $0x68] sm:$0xff] %vm738, %v1767
        %1784 = vst.msk [vmem:[%s393 + $0x70] sm:$0xff] %vm738, %v1768
        %1785 = vst.msk [vmem:[%s393 + $0x78] sm:$0xff] %vm738, %v1769
        %s1786 = sand.u32 %s190, 1
        %s1787 = scalar_lea.sflag [#allocation4], %s1786
        %s1788 = sand.u32 %s190, 1
        %s1789 = smul.addr %s1788, 128
        %s1790 = scalar_lea.vmem [#allocation10], %s1789
        // Predicated region
        $region57: #{tpu_custom_call.1} parent=39 // pred_check
          %p1791 = pneg %p200
        $region58: #{tpu_custom_call.1} parent=39 // pred_check_branch
          %1793 = sbr.rel (%p1791) target = $region60
        $region59: #{tpu_custom_call.1} parent=39 // pred_region
          %s1794 = smul.u32 8, %s31
          %1796 = vsyncadd %s1787, 0
          %s1797 = smul.addr %s1794, 2
          %s1798 = smul.addr %s30, 32
          %s1799 = sadd.s32 %s1797, %s1798
          %s1800 = smul.addr %s1799, 8
          %s1801 = scalar_lea.hbm %s5, %s1800
          %s1802 = sshll.u32 %s1790, 4
          %s1803 = int_to_ptr.vmem [resolvable:$true] %s1802
          %s1804 = sshll.u32 %s1801, 4
          %s1805 = int_to_ptr.hbm [resolvable:$true] %s1804
          %1810 = dma.vmem_to_hbm [thread:$0]  %s1803, 2048, %s1805, %s1787, 128, 128, 8
        $region60: #{tpu_custom_call.1} parent=39 // pred_fallthru
          _
      $region40: #{tpu_custom_call.1} parent=5 // pred_fallthru
        _
      %p1811 = scmp.le.s32.totalorder 2, %s21
      // Predicated region
      $region61: #{tpu_custom_call.1} parent=5 // pred_check
        %p1812 = pneg %p1811
      $region62: #{tpu_custom_call.1} parent=5 // pred_check_branch
        %1814 = sbr.rel (%p1812) target = $region64
      $region63: #{tpu_custom_call.1} parent=5 // pred_region
        %s1815 = ssub.s32 %s21, 2
        // Predicated region
        $region65: #{tpu_custom_call.1} parent=63 // pred_check
          %p1816 = pneg %p206
        $region66: #{tpu_custom_call.1} parent=63 // pred_check_branch
          %1818 = sbr.rel (%p1816) target = $region68
        $region67: #{tpu_custom_call.1} parent=63 // pred_region
          %s1819 = sand.u32 %s191, 1
          %s1820 = scalar_lea.sflag [#allocation4], %s1819
          %s1821 = sand.u32 %s191, 1
          %s1822 = smul.addr %s1821, 128
          %s1823 = scalar_lea.vmem [#allocation10], %s1822
          %1825 = dma.done %s1820, 2048
        $region68: #{tpu_custom_call.1} parent=63 // pred_fallthru
          _
      $region64: #{tpu_custom_call.1} parent=5 // pred_fallthru
        _
    $region6: #{tpu_custom_call.1} parent=1 // loop_footer
      %s25 = sadd.s32 1, %s21
    $region7: #{tpu_custom_call.1} parent=1 // loop_footer_branch
      %20 = sbr.rel target = $region3
    $region8: #{tpu_custom_call.1} parent=1 // loop_exit
      _
    %1826 = vsyncpa [#allocation3], 1
    %s1827 = scalar_lea.sflag [#allocation3], 1
    %1828 = vsyncpa %s1827, 1
    %1829 = vsyncpa [#allocation6], 1
    %s1830 = scalar_lea.sflag [#allocation6], 1
    %1831 = vsyncpa %s1830, 1
    %1832 = vsyncpa [#allocation9], 1
    %1833 = vsyncpa [#allocation4], 1
    %s1834 = scalar_lea.sflag [#allocation4], 1
    %1835 = vsyncpa %s1834, 1

</llo_original>
